<compile_context>
chip_gen: v7x
topology: tpu7x:2x2x1
jax: 0.10.0
libtpu: 0.0.40
codegen_flags: <defaults>
</compile_context>

<pallas_src>
import jax
import jax.numpy as jnp
import numpy as np
from jax import lax
from jax.experimental import pallas as pl
from jax.experimental.pallas import tpu as pltpu


def _round_up(x, m):
    return (x + m - 1) // m * m


def _attention_kernel(q_ref, keys_ref, wq_t_ref, bq_ref, wk_ref, bk_ref, out_ref):
    """One batch tile: q (TB, D), keys (TB, S, D), weights (D, D), biases (1, D)."""
    hp = lax.Precision.HIGHEST

    keys = keys_ref[...]                                    # (TB, S, D)
    q = q_ref[...]                                          # (TB, D)

    # Query projection: the only activation matmul left after fusing the key
    # projection into the score (full-height M tile on the MXU, f32 accum).
    q_proj = (jnp.dot(q, wq_t_ref[...],
                      preferred_element_type=jnp.float32, precision=hp)
              + bq_ref[...])                                # (TB, D) f32

    # Fused key projection (Wk in torch layout (D_out, D_in), no transpose):
    #   score[b, s] = <keys[b, s], q_proj[b] @ Wk> + <bk, q_proj[b]>
    v = jnp.dot(q_proj, wk_ref[...],
                preferred_element_type=jnp.float32, precision=hp)    # (TB, D)
    qb = jnp.sum(q_proj * bk_ref[...], axis=-1, keepdims=True)       # (TB, 1)

    # Scores: batches in sublanes, sequence in lanes -> (TB, S).
    score = jnp.sum(keys * v[:, None, :], axis=-1) + qb              # (TB, S) f32

    # Numerically stable softmax over the sequence axis (torch dim=1).
    # Exact divide (NOT pl.reciprocal(approx=True)) for parity with the ref.
    m = jnp.max(score, axis=-1, keepdims=True)                       # (TB, 1)
    e = jnp.exp(score - m)                                           # (TB, S)
    denom = jnp.sum(e, axis=-1, keepdims=True)                       # (TB, 1)
    weights = e / denom                                              # (TB, S)

    # out[b] = sum_s weights[b, s] * keys[b, s]  -> lane-dense (TB, D) slab.
    out = jnp.sum(weights[:, :, None] * keys, axis=1)                # (TB, D) f32
    out_ref[...] = out.astype(out_ref.dtype)


def _pick_batch_tile(B, S, D, keys_dtype, q_dtype, out_dtype, w_dtype):
    ki = jnp.dtype(keys_dtype).itemsize
    qi = jnp.dtype(q_dtype).itemsize
    oi = jnp.dtype(out_dtype).itemsize
    wi = jnp.dtype(w_dtype).itemsize
    # Sublane multiple for the batch (second-to-last) dim of the q/out blocks.
    sub = {4: 8, 2: 16, 1: 32}.get(min(ki, qi, oi), 8)

    # VMEM bytes that scale with TB: double-buffered pipeline blocks plus the
    # f32 elementwise temporaries the kernel materializes (keys*v, weights*keys).
    per_batch = (2 * S * D * ki          # keys block, double buffered
                 + 2 * D * qi            # query block, double buffered
                 + 2 * D * oi            # out block, double buffered
                 + 2 * S * D * 4         # in-kernel f32 temps
                 + 2 * D * 4             # q_proj, v
                 + 8 * S * 4)            # score / exp / weights row vectors
    # Fixed VMEM: both weight matrices + biases (double buffered) + slack.
    # TODO(synk): for very large D the (D, D) weight tiles need K-tiling; out of
    # scope here.
    fixed = 2 * 2 * D * D * wi + 2 * 2 * D * wi + (1 << 20)

    budget = 40 * 1024 * 1024            # < the 48 MiB limit; safe on v5e/v6e/v7x
    avail = max(budget - fixed, 0)
    cap = max(sub, (avail // max(per_batch, 1)) // sub * sub)
    cap = min(cap, 1024)                 # per-step overhead fully amortized long before this

    tb = min(cap, _round_up(B, sub))
    # Keep >= 2 grid steps when possible so the "parallel" batch-tile axis can
    # shard across both v7x TensorCores.
    if pl.cdiv(B, tb) < 2 and tb > sub:
        tb = max(sub, _round_up(pl.cdiv(B, 2), sub))
    return tb


def attention_unit(query, keys, wq, bq, wk, bk, *, batch_tile=None):
    """Forward pass of AttentionUnit.

    query: (B, D), keys: (B, S, D).
    wq, wk: torch-layout nn.Linear weights, shape (D_out, D_in).
    bq, bk: (D,).
    """
    B, D = query.shape
    _, S, _ = keys.shape
    dtype = query.dtype

    if batch_tile is None:
        tb = _pick_batch_tile(B, S, D, keys.dtype, query.dtype, dtype, wq.dtype)
    else:
        tb = max(8, _round_up(batch_tile, 8))

    # Pre-transpose Wq once (one-time; do at parameter-load time in a real
    # model).  Wk stays in torch layout so the kernel forms v = q_proj @ Wk.
    wq_t = jnp.transpose(wq)            # (D_in, D_out)
    bq2 = bq.reshape(1, D)
    bk2 = bk.reshape(1, D)

    return pl.pallas_call(
        _attention_kernel,
        out_shape=jax.ShapeDtypeStruct((B, D), dtype),
        grid_spec=pltpu.PrefetchScalarGridSpec(
            num_scalar_prefetch=0,
            grid=(pl.cdiv(B, tb),),
            in_specs=[
                pl.BlockSpec((tb, D), lambda i: (i, 0)),        # query batch tile
                pl.BlockSpec((tb, S, D), lambda i: (i, 0, 0)),  # keys batch tile
                pl.BlockSpec((D, D), lambda i: (0, 0)),         # Wq^T
                pl.BlockSpec((1, D), lambda i: (0, 0)),         # bq
                pl.BlockSpec((D, D), lambda i: (0, 0)),         # Wk (torch layout)
                pl.BlockSpec((1, D), lambda i: (0, 0)),         # bk
            ],
            out_specs=pl.BlockSpec((tb, D), lambda i: (i, 0)),
        ),
        compiler_params=pltpu.CompilerParams(
            dimension_semantics=("parallel",),   # batch-tile axis shards across TCs
            vmem_limit_bytes=48 * 1024 * 1024,
        ),
    )(query, keys, wq_t, bq2, wk, bk2)


def _reference(query, keys, wq, bq, wk, bk):
    hp = lax.Precision.HIGHEST
    q = jnp.dot(query, wq.T, precision=hp) + bq                      # (B, D)
    k = jnp.einsum("bsi,oi->bso", keys, wk, precision=hp) + bk       # (B, S, D)
    score = jnp.einsum("bsd,bd->bs", k, q, precision=hp)             # (B, S)
    w = jax.nn.softmax(score, axis=1)                                # (B, S)
    return jnp.einsum("bs,bsd->bd", w, keys, precision=hp)           # (B, D)


if __name__ == "__main__":
    B, S, D = 16, 8, 32
    key = jax.random.PRNGKey(0)
    kq, kk, kwq, kbq, kwk, kbk = jax.random.split(key, 6)

    query = jax.random.normal(kq, (B, D), dtype=jnp.float32)
    keys = jax.random.normal(kk, (B, S, D), dtype=jnp.float32)

    # torch nn.Linear default init: U(-1/sqrt(fan_in), 1/sqrt(fan_in)),
    # weights kept in torch layout (D_out, D_in).
    bound = 1.0 / np.sqrt(D)
    wq = jax.random.uniform(kwq, (D, D), jnp.float32, -bound, bound)
    bq = jax.random.uniform(kbq, (D,), jnp.float32, -bound, bound)
    wk = jax.random.uniform(kwk, (D, D), jnp.float32, -bound, bound)
    bk = jax.random.uniform(kbk, (D,), jnp.float32, -bound, bound)

    out = attention_unit(query, keys, wq, bq, wk, bk)
    out = jax.block_until_ready(out)

    ref = _reference(query, keys, wq, bq, wk, bk)
    np.testing.assert_allclose(np.asarray(out), np.asarray(ref), rtol=1e-3, atol=1e-3)

    print("KERNEL_OK")
</pallas_src>

<mosaic_0001>
module attributes {stable_mosaic.version = 11 : i64} {
  func.func @_attention_kernel(%arg0: i32, %arg1: memref<8x32xf32, #tpu.memory_space<vmem>>, %arg2: memref<8x8x32xf32, #tpu.memory_space<vmem>>, %arg3: memref<32x32xf32, #tpu.memory_space<vmem>>, %arg4: memref<1x32xf32, #tpu.memory_space<vmem>>, %arg5: memref<32x32xf32, #tpu.memory_space<vmem>>, %arg6: memref<1x32xf32, #tpu.memory_space<vmem>>, %arg7: memref<8x32xf32, #tpu.memory_space<vmem>>) attributes {dimension_semantics = [#tpu.dimension_semantics<parallel>], iteration_bounds = array<i64: 2>, scalar_prefetch = 0 : i64, scratch_operands = 0 : i64, tpu.core_type = #tpu.core_type<tc>, window_params = [{transform_indices = @transform_0, window_bounds = array<i64: 8, 32>}, {transform_indices = @transform_1, window_bounds = array<i64: 8, 8, 32>}, {pipeline_mode = #tpu.pipeline_mode<synchronous>, transform_indices = @transform_2, window_bounds = array<i64: 32, 32>}, {pipeline_mode = #tpu.pipeline_mode<synchronous>, transform_indices = @transform_3, window_bounds = array<i64: 1, 32>}, {pipeline_mode = #tpu.pipeline_mode<synchronous>, transform_indices = @transform_4, window_bounds = array<i64: 32, 32>}, {pipeline_mode = #tpu.pipeline_mode<synchronous>, transform_indices = @transform_5, window_bounds = array<i64: 1, 32>}, {transform_indices = @transform_6, window_bounds = array<i64: 8, 32>}]} {
    %c0 = arith.constant 0 : index
    %c0_0 = arith.constant 0 : index
    %c0_1 = arith.constant 0 : index
    %0 = vector.load %arg2[%c0, %c0_0, %c0_1] : memref<8x8x32xf32, #tpu.memory_space<vmem>>, vector<8x8x32xf32>
    %c0_2 = arith.constant 0 : index
    %c0_3 = arith.constant 0 : index
    %1 = vector.load %arg1[%c0_2, %c0_3] : memref<8x32xf32, #tpu.memory_space<vmem>>, vector<8x32xf32>
    %c0_4 = arith.constant 0 : index
    %c0_5 = arith.constant 0 : index
    %2 = vector.load %arg3[%c0_4, %c0_5] : memref<32x32xf32, #tpu.memory_space<vmem>>, vector<32x32xf32>
    %cst = arith.constant dense<0.000000e+00> : vector<8x32xf32>
    %3 = tpu.matmul %1, %2, %cst {dimension_numbers = #tpu.dot_dimension_numbers<[1], [0], [0], [1], [0, 0, 1, 1], [], []>, precision = #tpu.contract_precision<fp32>} : vector<8x32xf32>, vector<32x32xf32>, vector<8x32xf32> -> vector<8x32xf32>
    %c0_6 = arith.constant 0 : index
    %c0_7 = arith.constant 0 : index
    %4 = vector.load %arg4[%c0_6, %c0_7] : memref<1x32xf32, #tpu.memory_space<vmem>>, vector<1x32xf32>
    %5 = vector.broadcast %4 : vector<1x32xf32> to vector<8x32xf32>
    %6 = arith.addf %3, %5 : vector<8x32xf32>
    %c0_8 = arith.constant 0 : index
    %c0_9 = arith.constant 0 : index
    %7 = vector.load %arg5[%c0_8, %c0_9] : memref<32x32xf32, #tpu.memory_space<vmem>>, vector<32x32xf32>
    %cst_10 = arith.constant dense<0.000000e+00> : vector<8x32xf32>
    %8 = tpu.matmul %6, %7, %cst_10 {dimension_numbers = #tpu.dot_dimension_numbers<[1], [0], [0], [1], [0, 0, 1, 1], [], []>, precision = #tpu.contract_precision<fp32>} : vector<8x32xf32>, vector<32x32xf32>, vector<8x32xf32> -> vector<8x32xf32>
    %c0_11 = arith.constant 0 : index
    %c0_12 = arith.constant 0 : index
    %9 = vector.load %arg6[%c0_11, %c0_12] : memref<1x32xf32, #tpu.memory_space<vmem>>, vector<1x32xf32>
    %10 = vector.broadcast %9 : vector<1x32xf32> to vector<8x32xf32>
    %11 = arith.mulf %6, %10 : vector<8x32xf32>
    %cst_13 = arith.constant dense<0.000000e+00> : vector<8xf32>
    %12 = vector.multi_reduction <add>, %11, %cst_13 [1] : vector<8x32xf32> to vector<8xf32>
    %13 = vector.shape_cast %12 : vector<8xf32> to vector<8x1xf32>
    %14 = vector.shape_cast %8 : vector<8x32xf32> to vector<8x1x32xf32>
    %15 = vector.broadcast %14 : vector<8x1x32xf32> to vector<8x8x32xf32>
    %16 = arith.mulf %0, %15 : vector<8x8x32xf32>
    %cst_14 = arith.constant dense<0.000000e+00> : vector<8x8xf32>
    %17 = vector.multi_reduction <add>, %16, %cst_14 [2] : vector<8x8x32xf32> to vector<8x8xf32>
    %18 = vector.broadcast %13 : vector<8x1xf32> to vector<8x8xf32>
    %19 = arith.addf %17, %18 : vector<8x8xf32>
    %cst_15 = arith.constant dense<0xFF800000> : vector<8xf32>
    %20 = vector.multi_reduction <maximumf>, %19, %cst_15 [1] : vector<8x8xf32> to vector<8xf32>
    %21 = vector.shape_cast %20 : vector<8xf32> to vector<8x1xf32>
    %22 = vector.broadcast %21 : vector<8x1xf32> to vector<8x8xf32>
    %23 = arith.subf %19, %22 : vector<8x8xf32>
    %24 = math.exp %23 : vector<8x8xf32>
    %cst_16 = arith.constant dense<0.000000e+00> : vector<8xf32>
    %25 = vector.multi_reduction <add>, %24, %cst_16 [1] : vector<8x8xf32> to vector<8xf32>
    %26 = vector.shape_cast %25 : vector<8xf32> to vector<8x1xf32>
    %27 = vector.broadcast %26 : vector<8x1xf32> to vector<8x8xf32>
    %28 = arith.divf %24, %27 : vector<8x8xf32>
    %29 = vector.shape_cast %28 : vector<8x8xf32> to vector<8x8x1xf32>
    %30 = vector.broadcast %29 : vector<8x8x1xf32> to vector<8x8x32xf32>
    %31 = arith.mulf %30, %0 : vector<8x8x32xf32>
    %cst_17 = arith.constant dense<0.000000e+00> : vector<8x32xf32>
    %32 = vector.multi_reduction <add>, %31, %cst_17 [1] : vector<8x8x32xf32> to vector<8x32xf32>
    %c0_18 = arith.constant 0 : index
    %c0_19 = arith.constant 0 : index
    %33 = vector.load %arg7[%c0_18, %c0_19] : memref<8x32xf32, #tpu.memory_space<vmem>>, vector<8x32xf32>
    tpu.vector_store %arg7[%c0_18, %c0_19], %32 {strides = array<i32>} : memref<8x32xf32, #tpu.memory_space<vmem>>, vector<8x32xf32>,
    return
  }
  func.func @transform_0(%arg0: i32) -> (i32, i32) {
    %c0_i32 = arith.constant 0 : i32
    %c0_i32_0 = arith.constant 0 : i32
    return %arg0, %c0_i32 : i32, i32
  }
  func.func @transform_1(%arg0: i32) -> (i32, i32, i32) {
    %c0_i32 = arith.constant 0 : i32
    %c0_i32_0 = arith.constant 0 : i32
    %c0_i32_1 = arith.constant 0 : i32
    return %arg0, %c0_i32, %c0_i32_0 : i32, i32, i32
  }
  func.func @transform_2(%arg0: i32) -> (i32, i32) {
    %c0_i32 = arith.constant 0 : i32
    %c0_i32_0 = arith.constant 0 : i32
    %c0_i32_1 = arith.constant 0 : i32
    return %c0_i32, %c0_i32_0 : i32, i32
  }
  func.func @transform_3(%arg0: i32) -> (i32, i32) {
    %c0_i32 = arith.constant 0 : i32
    %c0_i32_0 = arith.constant 0 : i32
    %c0_i32_1 = arith.constant 0 : i32
    return %c0_i32, %c0_i32_0 : i32, i32
  }
  func.func @transform_4(%arg0: i32) -> (i32, i32) {
    %c0_i32 = arith.constant 0 : i32
    %c0_i32_0 = arith.constant 0 : i32
    %c0_i32_1 = arith.constant 0 : i32
    return %c0_i32, %c0_i32_0 : i32, i32
  }
  func.func @transform_5(%arg0: i32) -> (i32, i32) {
    %c0_i32 = arith.constant 0 : i32
    %c0_i32_0 = arith.constant 0 : i32
    %c0_i32_1 = arith.constant 0 : i32
    return %c0_i32, %c0_i32_0 : i32, i32
  }
  func.func @transform_6(%arg0: i32) -> (i32, i32) {
    %c0_i32 = arith.constant 0 : i32
    %c0_i32_0 = arith.constant 0 : i32
    return %arg0, %c0_i32 : i32, i32
  }
}

</mosaic_0001>

<llo_original>
// kernel: tpu_custom_call.1
$region0: #{tpu_custom_call.1}
  #allocation0 [shape = 'u32[]', space=smem, size = 0x4, offset = 0x4, fixed_abs, tag = 'smem constant byte address 0x4 - core index']
  #allocation1 [shape = 'u32[144,128]{1,0:T(1,128)}', space=vmem, size = 0x12000, scoped, tag = 'internal scratch']
  %s0 = inlined_call_operand.hbm [shape: f32[16,32], index: 0, kind: input, shape index: {}]
  %s1 = inlined_call_operand.hbm [shape: f32[16,8,32], index: 1, kind: input, shape index: {}]
  %s2 = inlined_call_operand.hbm [shape: f32[32,32], index: 2, kind: input, shape index: {}]
  %s3 = inlined_call_operand.vmem [shape: f32[1,32], index: 3, kind: input, shape index: {}]
  %s4 = inlined_call_operand.hbm [shape: f32[32,32], index: 4, kind: input, shape index: {}]
  %s5 = inlined_call_operand.vmem [shape: f32[1,32], index: 5, kind: input, shape index: {}]
  %s6 = inlined_call_operand.hbm [shape: f32[16,32], index: 6, kind: output, shape index: {}]
  %s7 = sld [smem:[#allocation0]]
  $region73: #{tpu_custom_call.1} parent=0
    _
  %s9 = ssub.s32 1, %s7
  %s10 = scalar_select 0, %s9, %s7
  $region1: #{tpu_custom_call.1} parent=0
    #allocation2 [shape = 'u8[8192]{0}', space=vmem, size = 0x2000, scoped, tag = 'input window, operand 0']
    #allocation3 [shape = 's32[2]{0}', space=sflag, size = 0x8, scoped, tag = 'scoped memory for tpu_custom_call.1']
    #allocation4 [shape = 's32[2]{0}', space=sflag, size = 0x8, scoped, tag = 'scoped memory for tpu_custom_call.1']
    #allocation5 [shape = 'u8[65536]{0}', space=vmem, size = 0x10000, scoped, tag = 'input window, operand 1']
    #allocation6 [shape = 's32[2]{0}', space=sflag, size = 0x8, scoped, tag = 'scoped memory for tpu_custom_call.1']
    #allocation7 [shape = 'u8[16384]{0}', space=vmem, size = 0x4000, scoped, tag = 'input window, operand 2, single buffered']
    #allocation8 [shape = 'u8[16384]{0}', space=vmem, size = 0x4000, scoped, tag = 'input window, operand 4, single buffered']
    #allocation9 [shape = 's32[1]{0}', space=sflag, size = 0x4, scoped, tag = 'scoped memory for tpu_custom_call.1']
    #allocation10 [shape = 'u8[8192]{0}', space=vmem, size = 0x2000, scoped, tag = 'output window, operand 0']
    %11 = vsyncpa [#allocation3], 0
    %s12 = scalar_lea.sflag [#allocation3], 1
    %13 = vsyncpa %s12, 0
    %14 = vsyncpa [#allocation6], 0
    %s15 = scalar_lea.sflag [#allocation6], 1
    %16 = vsyncpa %s15, 0
    %17 = vsyncpa [#allocation9], 0
    %18 = vsyncpa [#allocation4], 0
    %s19 = scalar_lea.sflag [#allocation4], 1
    %20 = vsyncpa %s19, 0
    loop: start=0, step=1, limit=4
    $region2: #{tpu_custom_call.1} parent=1 // loop_pre_header
      _
    $region3: #{tpu_custom_call.1} parent=1 // loop_header
      %s22 = sphi 0, %s26
      %p23 = scmp.ge.s32.totalorder %s22, 4
      %s32 = sphi 0, %s34
      %s35 = sphi 0, %s32
      %s36 = sphi 0, %s35
      %s52 = sphi 0, %s36
      %s58 = sphi 0, %s60
      %s61 = sphi 0, %s58
      %s62 = sphi 0, %s61
      %s78 = sphi 0, %s62
      %s82 = sphi 0, %s82
      %s84 = sphi 0, %s82
      %s85 = sphi 0, %s84
      %s99 = sphi 0, %s85
      %s103 = sphi 0, %s103
      %s105 = sphi 0, %s103
      %s106 = sphi 0, %s105
      %s120 = sphi 0, %s106
      %s124 = sphi 0, %s124
      %s126 = sphi 0, %s124
      %s127 = sphi 0, %s126
      %s141 = sphi 0, %s127
      %s145 = sphi 0, %s145
      %s147 = sphi 0, %s145
      %s148 = sphi 0, %s147
      %s162 = sphi 0, %s148
      %s168 = sphi 0, %s170
      %s171 = sphi 0, %s168
      %s172 = sphi 0, %s171
      %s188 = sphi 0, %s172
    $region4: #{tpu_custom_call.1} parent=1 // loop_header_branch
      %25 = sbr.rel (%p23) target = $region8
    $region5: #{tpu_custom_call.1} parent=1 // loop_body
      %s27 = ssub.s32 %s22, 1
      %s28 = ssub.s32 %s22, 2
      %s29 = sadd.s32 %s22, 1
      %s30 = ssub.s32 %s22, %s29
      %p31 = scmp.eq.s32.totalorder %s30, 0
      %s33 = sadd.s32 %s32, 1
      %s34 = scalar_select %p31, %s32, %s33
      %p37 = pneg %p31
      %p38 = scmp.eq.s32.totalorder %s22, 1
      %p39 = por %p37, %p38
      %p40 = scmp.ne.s32.totalorder %s32, %s35
      %p41 = scmp.eq.s32.totalorder %s22, 0
      %p42 = por %p40, %p41
      %p43 = scmp.ne.s32.totalorder %s32, %s35
      %p44 = scmp.eq.s32.totalorder %s27, 1
      %p45 = por %p43, %p44
      %p46 = scmp.ne.s32.totalorder %s35, %s36
      %p47 = scmp.eq.s32.totalorder %s27, 0
      %p48 = por %p46, %p47
      %p49 = scmp.ne.s32.totalorder %s35, %s36
      %p50 = scmp.eq.s32.totalorder %s28, 1
      %p51 = por %p49, %p50
      %p53 = scmp.ne.s32.totalorder %s36, %s52
      %p54 = scmp.eq.s32.totalorder %s28, 0
      %p55 = por %p53, %p54
      %s56 = ssub.s32 %s22, %s29
      %p57 = scmp.eq.s32.totalorder %s56, 0
      %s59 = sadd.s32 %s58, 1
      %s60 = scalar_select %p57, %s58, %s59
      %p63 = pneg %p57
      %p64 = scmp.eq.s32.totalorder %s22, 1
      %p65 = por %p63, %p64
      %p66 = scmp.ne.s32.totalorder %s58, %s61
      %p67 = scmp.eq.s32.totalorder %s22, 0
      %p68 = por %p66, %p67
      %p69 = scmp.ne.s32.totalorder %s58, %s61
      %p70 = scmp.eq.s32.totalorder %s27, 1
      %p71 = por %p69, %p70
      %p72 = scmp.ne.s32.totalorder %s61, %s62
      %p73 = scmp.eq.s32.totalorder %s27, 0
      %p74 = por %p72, %p73
      %p75 = scmp.ne.s32.totalorder %s61, %s62
      %p76 = scmp.eq.s32.totalorder %s28, 1
      %p77 = por %p75, %p76
      %p79 = scmp.ne.s32.totalorder %s62, %s78
      %p80 = scmp.eq.s32.totalorder %s28, 0
      %p81 = por %p79, %p80
      %s83 = sadd.s32 %s82, 1
      %p86 = scmp.eq.s32.totalorder %s22, 1
      %p87 = scmp.ne.s32.totalorder %s82, %s84
      %p88 = scmp.eq.s32.totalorder %s22, 0
      %p89 = por %p87, %p88
      %p90 = scmp.ne.s32.totalorder %s82, %s84
      %p91 = scmp.eq.s32.totalorder %s27, 1
      %p92 = por %p90, %p91
      %p93 = scmp.ne.s32.totalorder %s84, %s85
      %p94 = scmp.eq.s32.totalorder %s27, 0
      %p95 = por %p93, %p94
      %p96 = scmp.ne.s32.totalorder %s84, %s85
      %p97 = scmp.eq.s32.totalorder %s28, 1
      %p98 = por %p96, %p97
      %p100 = scmp.ne.s32.totalorder %s85, %s99
      %p101 = scmp.eq.s32.totalorder %s28, 0
      %p102 = por %p100, %p101
      %s104 = sadd.s32 %s103, 1
      %p107 = scmp.eq.s32.totalorder %s22, 1
      %p108 = scmp.ne.s32.totalorder %s103, %s105
      %p109 = scmp.eq.s32.totalorder %s22, 0
      %p110 = por %p108, %p109
      %p111 = scmp.ne.s32.totalorder %s103, %s105
      %p112 = scmp.eq.s32.totalorder %s27, 1
      %p113 = por %p111, %p112
      %p114 = scmp.ne.s32.totalorder %s105, %s106
      %p115 = scmp.eq.s32.totalorder %s27, 0
      %p116 = por %p114, %p115
      %p117 = scmp.ne.s32.totalorder %s105, %s106
      %p118 = scmp.eq.s32.totalorder %s28, 1
      %p119 = por %p117, %p118
      %p121 = scmp.ne.s32.totalorder %s106, %s120
      %p122 = scmp.eq.s32.totalorder %s28, 0
      %p123 = por %p121, %p122
      %s125 = sadd.s32 %s124, 1
      %p128 = scmp.eq.s32.totalorder %s22, 1
      %p129 = scmp.ne.s32.totalorder %s124, %s126
      %p130 = scmp.eq.s32.totalorder %s22, 0
      %p131 = por %p129, %p130
      %p132 = scmp.ne.s32.totalorder %s124, %s126
      %p133 = scmp.eq.s32.totalorder %s27, 1
      %p134 = por %p132, %p133
      %p135 = scmp.ne.s32.totalorder %s126, %s127
      %p136 = scmp.eq.s32.totalorder %s27, 0
      %p137 = por %p135, %p136
      %p138 = scmp.ne.s32.totalorder %s126, %s127
      %p139 = scmp.eq.s32.totalorder %s28, 1
      %p140 = por %p138, %p139
      %p142 = scmp.ne.s32.totalorder %s127, %s141
      %p143 = scmp.eq.s32.totalorder %s28, 0
      %p144 = por %p142, %p143
      %s146 = sadd.s32 %s145, 1
      %p149 = scmp.eq.s32.totalorder %s22, 1
      %p150 = scmp.ne.s32.totalorder %s145, %s147
      %p151 = scmp.eq.s32.totalorder %s22, 0
      %p152 = por %p150, %p151
      %p153 = scmp.ne.s32.totalorder %s145, %s147
      %p154 = scmp.eq.s32.totalorder %s27, 1
      %p155 = por %p153, %p154
      %p156 = scmp.ne.s32.totalorder %s147, %s148
      %p157 = scmp.eq.s32.totalorder %s27, 0
      %p158 = por %p156, %p157
      %p159 = scmp.ne.s32.totalorder %s147, %s148
      %p160 = scmp.eq.s32.totalorder %s28, 1
      %p161 = por %p159, %p160
      %p163 = scmp.ne.s32.totalorder %s148, %s162
      %p164 = scmp.eq.s32.totalorder %s28, 0
      %p165 = por %p163, %p164
      %s166 = ssub.s32 %s22, %s29
      %p167 = scmp.eq.s32.totalorder %s166, 0
      %s169 = sadd.s32 %s168, 1
      %s170 = scalar_select %p167, %s168, %s169
      %p173 = pneg %p167
      %p174 = scmp.eq.s32.totalorder %s22, 1
      %p175 = por %p173, %p174
      %p176 = scmp.ne.s32.totalorder %s168, %s171
      %p177 = scmp.eq.s32.totalorder %s22, 0
      %p178 = por %p176, %p177
      %p179 = scmp.ne.s32.totalorder %s168, %s171
      %p180 = scmp.eq.s32.totalorder %s27, 1
      %p181 = por %p179, %p180
      %p182 = scmp.ne.s32.totalorder %s171, %s172
      %p183 = scmp.eq.s32.totalorder %s27, 0
      %p184 = por %p182, %p183
      %p185 = scmp.ne.s32.totalorder %s171, %s172
      %p186 = scmp.eq.s32.totalorder %s28, 1
      %p187 = por %p185, %p186
      %p189 = scmp.ne.s32.totalorder %s172, %s188
      %p190 = scmp.eq.s32.totalorder %s28, 0
      %p191 = por %p189, %p190
      %p192 = scmp.le.s32.totalorder 1, %s22
      %p193 = scmp.lt.s32.totalorder %s22, 3
      %p194 = pnand %p192, %p193
      %p195 = pneg %p194
      // Predicated region
      $region9: #{tpu_custom_call.1} parent=5 // pred_check
        _
      $region10: #{tpu_custom_call.1} parent=5 // pred_check_branch
        %197 = sbr.rel (%p194) target = $region12
      $region11: #{tpu_custom_call.1} parent=5 // pred_region
        %s198 = ssub.s32 %s22, 1
        // Predicated region
        $region13: #{tpu_custom_call.1} parent=11 // pred_check
          %p199 = pneg %p95
        $region14: #{tpu_custom_call.1} parent=11 // pred_check_branch
          %201 = sbr.rel (%p199) target = $region16
        $region15: #{tpu_custom_call.1} parent=11 // pred_region
          %s203 = ssub.s32 512, 512
          %204 = vsyncadd [#allocation6], %s203
          %s205 = sshll.u32 [#allocation7], 4
          %s206 = int_to_ptr.vmem [resolvable:$true] %s205
          %211 = dma.hbm_to_vmem [thread:$0]  %s2, 512, %s206, [#allocation6], 128, 128, 8
        $region16: #{tpu_custom_call.1} parent=11 // pred_fallthru
          _
        // Predicated region
        $region17: #{tpu_custom_call.1} parent=11 // pred_check
          %p212 = pneg %p116
        $region18: #{tpu_custom_call.1} parent=11 // pred_check_branch
          %214 = sbr.rel (%p212) target = $region20
        $region19: #{tpu_custom_call.1} parent=11 // pred_region
          _
        $region20: #{tpu_custom_call.1} parent=11 // pred_fallthru
          _
        // Predicated region
        $region21: #{tpu_custom_call.1} parent=11 // pred_check
          %p215 = pneg %p137
        $region22: #{tpu_custom_call.1} parent=11 // pred_check_branch
          %217 = sbr.rel (%p215) target = $region24
        $region23: #{tpu_custom_call.1} parent=11 // pred_region
          %s219 = ssub.s32 512, 512
          %220 = vsyncadd [#allocation9], %s219
          %s221 = sshll.u32 [#allocation8], 4
          %s222 = int_to_ptr.vmem [resolvable:$true] %s221
          %227 = dma.hbm_to_vmem [thread:$0]  %s4, 512, %s222, [#allocation9], 128, 128, 8
        $region24: #{tpu_custom_call.1} parent=11 // pred_fallthru
          _
        // Predicated region
        $region25: #{tpu_custom_call.1} parent=11 // pred_check
          %p228 = pneg %p158
        $region26: #{tpu_custom_call.1} parent=11 // pred_check_branch
          %230 = sbr.rel (%p228) target = $region28
        $region27: #{tpu_custom_call.1} parent=11 // pred_region
          _
        $region28: #{tpu_custom_call.1} parent=11 // pred_fallthru
          _
      $region12: #{tpu_custom_call.1} parent=5 // pred_fallthru
        _
      %p231 = scmp.lt.s32.totalorder %s22, 2
      // Predicated region
      $region29: #{tpu_custom_call.1} parent=5 // pred_check
        %p232 = pneg %p231
      $region30: #{tpu_custom_call.1} parent=5 // pred_check_branch
        %234 = sbr.rel (%p232) target = $region32
      $region31: #{tpu_custom_call.1} parent=5 // pred_region
        // Predicated region
        $region33: #{tpu_custom_call.1} parent=31 // pred_check
          %p235 = pneg %p42
        $region34: #{tpu_custom_call.1} parent=31 // pred_check_branch
          %237 = sbr.rel (%p235) target = $region36
        $region35: #{tpu_custom_call.1} parent=31 // pred_region
          %s238 = sand.u32 %s32, 1
          %s239 = scalar_lea.sflag [#allocation3], %s238
          %s240 = sand.u32 %s32, 1
          %s241 = smul.addr %s240, 8
          %s242 = scalar_lea.vmem [#allocation2], %s241
          %s244 = ssub.s32 128, 128
          %245 = vsyncadd %s239, %s244
          %s246 = smul.addr %s22, 128
          %s247 = scalar_lea.hbm %s0, %s246
          %s249 = sshll.u32 %s242, 4
          %s250 = int_to_ptr.vmem [resolvable:$true] %s249
          %252 = dma.hbm_to_vmem [thread:$0]  %s247, 128, %s250, %s239
        $region36: #{tpu_custom_call.1} parent=31 // pred_fallthru
          _
        // Predicated region
        $region37: #{tpu_custom_call.1} parent=31 // pred_check
          %p253 = pneg %p68
        $region38: #{tpu_custom_call.1} parent=31 // pred_check_branch
          %255 = sbr.rel (%p253) target = $region40
        $region39: #{tpu_custom_call.1} parent=31 // pred_region
          %s256 = sand.u32 %s22, 1
          %s257 = scalar_lea.sflag [#allocation6], %s256
          %s258 = sand.u32 %s58, 1
          %s259 = smul.addr %s258, 64
          %s260 = scalar_lea.vmem [#allocation5], %s259
          %s261 = smul.u32 8, %s22
          %s263 = ssub.s32 1024, 1024
          %264 = vsyncadd %s257, %s263
          %s265 = smul.addr %s261, 128
          %s266 = scalar_lea.hbm %s1, %s265
          %s267 = sshll.u32 %s260, 4
          %s268 = int_to_ptr.vmem [resolvable:$true] %s267
          %273 = dma.hbm_to_vmem [thread:$0]  %s266, 1024, %s268, %s257, 128, 128, 8
        $region40: #{tpu_custom_call.1} parent=31 // pred_fallthru
          _
      $region32: #{tpu_custom_call.1} parent=5 // pred_fallthru
        _
      %p274 = scmp.le.s32.totalorder 1, %s22
      %p275 = scmp.lt.s32.totalorder %s22, 3
      %p276 = pnand %p274, %p275
      %p277 = pneg %p276
      // Predicated region
      $region41: #{tpu_custom_call.1} parent=5 // pred_check
        _
      $region42: #{tpu_custom_call.1} parent=5 // pred_check_branch
        %279 = sbr.rel (%p276) target = $region44
      $region43: #{tpu_custom_call.1} parent=5 // pred_region
        %s280 = ssub.s32 %s22, 1
        %s281 = sand.u32 %s35, 1
        %s282 = scalar_lea.sflag [#allocation3], %s281
        %s283 = sand.u32 %s35, 1
        %s284 = smul.addr %s283, 8
        %s285 = scalar_lea.vmem [#allocation2], %s284
        // Predicated region
        $region45: #{tpu_custom_call.1} parent=43 // pred_check
          %p286 = pneg %p48
        $region46: #{tpu_custom_call.1} parent=43 // pred_check_branch
          %288 = sbr.rel (%p286) target = $region48
        $region47: #{tpu_custom_call.1} parent=43 // pred_region
          %289 = dma.done %s282, 128
        $region48: #{tpu_custom_call.1} parent=43 // pred_fallthru
          _
        %s290 = sand.u32 %s27, 1
        %s291 = scalar_lea.sflag [#allocation6], %s290
        %s292 = sand.u32 %s61, 1
        %s293 = smul.addr %s292, 64
        %s294 = scalar_lea.vmem [#allocation5], %s293
        // Predicated region
        $region49: #{tpu_custom_call.1} parent=43 // pred_check
          %p295 = pneg %p74
        $region50: #{tpu_custom_call.1} parent=43 // pred_check_branch
          %297 = sbr.rel (%p295) target = $region52
        $region51: #{tpu_custom_call.1} parent=43 // pred_region
          %298 = dma.done %s291, 1024
        $region52: #{tpu_custom_call.1} parent=43 // pred_fallthru
          _
        // Predicated region
        $region53: #{tpu_custom_call.1} parent=43 // pred_check
          %p299 = pneg %p95
        $region54: #{tpu_custom_call.1} parent=43 // pred_check_branch
          %301 = sbr.rel (%p299) target = $region56
        $region55: #{tpu_custom_call.1} parent=43 // pred_region
          %302 = dma.done [#allocation6], 512
        $region56: #{tpu_custom_call.1} parent=43 // pred_fallthru
          _
        // Predicated region
        $region57: #{tpu_custom_call.1} parent=43 // pred_check
          %p303 = pneg %p137
        $region58: #{tpu_custom_call.1} parent=43 // pred_check_branch
          %305 = sbr.rel (%p303) target = $region60
        $region59: #{tpu_custom_call.1} parent=43 // pred_region
          %306 = dma.done [#allocation9], 512
        $region60: #{tpu_custom_call.1} parent=43 // pred_fallthru
          _
        %s307 = sand.u32 %s35, 1
        %s308 = scalar_lea.sflag [#allocation3], %s307
        %s309 = sand.u32 %s35, 1
        %s310 = smul.addr %s309, 8
        %s311 = scalar_lea.vmem [#allocation2], %s310
        %p312 = pneg %p48
        %p313 = pneg %p45
        %s314 = sand.u32 %s27, 1
        %s315 = scalar_lea.sflag [#allocation6], %s314
        %s316 = sand.u32 %s61, 1
        %s317 = smul.addr %s316, 64
        %s318 = scalar_lea.vmem [#allocation5], %s317
        %p319 = pneg %p74
        %p320 = pneg %p71
        %p321 = pneg %p95
        %p322 = pneg %p92
        %p323 = pneg %p116
        %p324 = pneg %p113
        %p325 = pneg %p137
        %p326 = pneg %p134
        %p327 = pneg %p158
        %p328 = pneg %p155
        %p329 = pneg %p184
        %p330 = pneg %p181
        %s331 = sand.u32 %s171, 1
        %s332 = scalar_lea.sflag [#allocation4], %s331
        %s333 = sand.u32 %s171, 1
        %s334 = smul.addr %s333, 8
        %s335 = scalar_lea.vmem [#allocation10], %s334
        %s336 = smul.u32 8, %s27
        %v337 = vld [vmem:[%s294] sm:$0xff]
        %v338 = vld [vmem:[%s294 + $0x8] sm:$0xff]
        %v339 = vld [vmem:[%s294 + $0x10] sm:$0xff]
        %v340 = vld [vmem:[%s294 + $0x18] sm:$0xff]
        %v341 = vld [vmem:[%s294 + $0x20] sm:$0xff]
        %v342 = vld [vmem:[%s294 + $0x28] sm:$0xff]
        %v343 = vld [vmem:[%s294 + $0x30] sm:$0xff]
        %v344 = vld [vmem:[%s294 + $0x38] sm:$0xff]
        %v345 = vld [vmem:[%s285] sm:$0xff]
        %v346 = vld [vmem:[#allocation7] sm:$0xff]
        %v347 = vld [vmem:[#allocation7 + $0x8] sm:$0xff]
        %v348 = vld [vmem:[#allocation7 + $0x10] sm:$0xff]
        %v349 = vld [vmem:[#allocation7 + $0x18] sm:$0xff]
        %v350 = vld [vmem:[%s3] sm:$0x1]
        %v352 = vlaneseq
        %v353 = vshrl.u32 %v352, 7
        %v354 = vsub.s32 0, %v353
        %v355 = vrot.slane %v350, %v354
        %vm357 = vcmask 261120
        %v359 = vsel %vm357, %v345, 0
        %361 = vmatprep.subr.mxu0 0.0
        %v362 = vand.u32 %v346, 4294901760
        %363 = vmatpush1.msra.mxu0 %v362
        %364 = vmatprep.subr.mxu0 0.0
        %v365 = vand.u32 %v347, 4294901760
        %366 = vmatpush1.msra.mxu0 %v365
        %367 = vmatprep.subr.mxu0 0.0
        %v368 = vand.u32 %v348, 4294901760
        %369 = vmatpush1.msra.mxu0 %v368
        %370 = vmatprep.subr.mxu0 0.0
        %v371 = vand.u32 %v349, 4294901760
        %372 = vmatpush1.msra.mxu0 %v371
        %373 = vmatprep.subr.mxu0 0.0
        %374 = vmatpush1.msra.mxu0 0.0
        %375 = vmatprep.subr.mxu0 0.0
        %376 = vmatpush1.msra.mxu0 0.0
        %377 = vmatprep.subr.mxu0 0.0
        %378 = vmatpush1.msra.mxu0 0.0
        %379 = vmatprep.subr.mxu0 0.0
        %380 = vmatpush1.msra.mxu0 0.0
        %381 = vmatprep.subr.mxu0 0.0
        %382 = vmatpush1.msra.mxu0 0.0
        %383 = vmatprep.subr.mxu0 0.0
        %384 = vmatpush1.msra.mxu0 0.0
        %385 = vmatprep.subr.mxu0 0.0
        %386 = vmatpush1.msra.mxu0 0.0
        %387 = vmatprep.subr.mxu0 0.0
        %388 = vmatpush1.msra.mxu0 0.0
        %389 = vmatprep.subr.mxu0 0.0
        %390 = vmatpush1.msra.mxu0 0.0
        %391 = vmatprep.subr.mxu0 0.0
        %392 = vmatpush1.msra.mxu0 0.0
        %393 = vmatprep.subr.mxu0 0.0
        %394 = vmatpush1.msra.mxu0 0.0
        %395 = vmatprep.subr.mxu0 0.0
        %396 = vmatpush1.msra.mxu0 0.0
        %397 = vmatprep.subr.mxu0 0.0
        %398 = vmatpush1.msra.mxu0 0.0
        %399 = vmatprep.subr.mxu0 0.0
        %400 = vmatpush1.msra.mxu0 0.0
        %401 = vmatprep.subr.mxu0 0.0
        %402 = vmatpush1.msra.mxu0 0.0
        %403 = vmatprep.subr.mxu0 0.0
        %404 = vmatpush1.msra.mxu0 0.0
        %405 = vmatprep.subr.mxu0 0.0
        %406 = vmatpush1.msra.mxu0 0.0
        %407 = vmatprep.subr.mxu0 0.0
        %408 = vmatpush1.msra.mxu0 0.0
        %409 = vmatprep.subr.mxu0 0.0
        %410 = vmatpush1.msra.mxu0 0.0
        %411 = vmatprep.subr.mxu0 0.0
        %412 = vmatpush1.msra.mxu0 0.0
        %413 = vmatprep.subr.mxu0 0.0
        %414 = vmatpush1.msra.mxu0 0.0
        %415 = vmatprep.subr.mxu0 0.0
        %416 = vmatpush1.msra.mxu0 0.0
        %417 = vmatprep.subr.mxu0 0.0
        %418 = vmatpush1.msra.mxu0 0.0
        %419 = vmatprep.subr.mxu0 0.0
        %420 = vmatpush1.msra.mxu0 0.0
        %421 = vmatprep.subr.mxu0 0.0
        %422 = vmatpush1.msra.mxu0 0.0
        %423 = vmatprep.subr.mxu0 0.0
        %424 = vmatpush1.msra.mxu0 0.0
        %425 = vmatprep.subr.mxu0 0.0
        %426 = vmatpush1.msra.mxu0 0.0
        %427 = vmatprep.subr.mxu0 0.0
        %428 = vmatpush1.msra.mxu0 0.0
        %429 = vmatprep.mubr.f32.mxu0 0.0
        %v430 = vand.u32 %v359, 4294901760
        %v431 = vsub.f32 %v359, %v430
        %v432 = vand.u32 %v431, 4294901760
        %v433 = vsub.f32 %v431, %v432
        %v434 = vand.u32 %v433, 4294901760
        %435 = vmatmul.mubr.f32.gmra.mrb[0].mxu0 %v434
        %v436 = vpop.f32.mrb[0].mxu0
        %v437 = vadd.f32 %v355, %v436
        %v438 = vpop.f32.mrb[0].mxu0
        %439 = vdwg.mxu0
        %440 = vmatprep.subr.mxu0 0.0
        %v441 = vand.u32 %v346, 4294901760
        %v442 = vsub.f32 %v346, %v441
        %v443 = vand.u32 %v442, 4294901760
        %v444 = vsub.f32 %v442, %v443
        %v445 = vand.u32 %v444, 4294901760
        %446 = vmatpush1.msra.mxu0 %v445
        %447 = vmatprep.subr.mxu0 0.0
        %v448 = vand.u32 %v347, 4294901760
        %v449 = vsub.f32 %v347, %v448
        %v450 = vand.u32 %v449, 4294901760
        %v451 = vsub.f32 %v449, %v450
        %v452 = vand.u32 %v451, 4294901760
        %453 = vmatpush1.msra.mxu0 %v452
        %454 = vmatprep.subr.mxu0 0.0
        %v455 = vand.u32 %v348, 4294901760
        %v456 = vsub.f32 %v348, %v455
        %v457 = vand.u32 %v456, 4294901760
        %v458 = vsub.f32 %v456, %v457
        %v459 = vand.u32 %v458, 4294901760
        %460 = vmatpush1.msra.mxu0 %v459
        %461 = vmatprep.subr.mxu0 0.0
        %v462 = vand.u32 %v349, 4294901760
        %v463 = vsub.f32 %v349, %v462
        %v464 = vand.u32 %v463, 4294901760
        %v465 = vsub.f32 %v463, %v464
        %v466 = vand.u32 %v465, 4294901760
        %467 = vmatpush1.msra.mxu0 %v466
        %468 = vmatprep.subr.mxu0 0.0
        %469 = vmatpush1.msra.mxu0 0.0
        %470 = vmatprep.subr.mxu0 0.0
        %471 = vmatpush1.msra.mxu0 0.0
        %472 = vmatprep.subr.mxu0 0.0
        %473 = vmatpush1.msra.mxu0 0.0
        %474 = vmatprep.subr.mxu0 0.0
        %475 = vmatpush1.msra.mxu0 0.0
        %476 = vmatprep.subr.mxu0 0.0
        %477 = vmatpush1.msra.mxu0 0.0
        %478 = vmatprep.subr.mxu0 0.0
        %479 = vmatpush1.msra.mxu0 0.0
        %480 = vmatprep.subr.mxu0 0.0
        %481 = vmatpush1.msra.mxu0 0.0
        %482 = vmatprep.subr.mxu0 0.0
        %483 = vmatpush1.msra.mxu0 0.0
        %484 = vmatprep.subr.mxu0 0.0
        %485 = vmatpush1.msra.mxu0 0.0
        %486 = vmatprep.subr.mxu0 0.0
        %487 = vmatpush1.msra.mxu0 0.0
        %488 = vmatprep.subr.mxu0 0.0
        %489 = vmatpush1.msra.mxu0 0.0
        %490 = vmatprep.subr.mxu0 0.0
        %491 = vmatpush1.msra.mxu0 0.0
        %492 = vmatprep.subr.mxu0 0.0
        %493 = vmatpush1.msra.mxu0 0.0
        %494 = vmatprep.subr.mxu0 0.0
        %495 = vmatpush1.msra.mxu0 0.0
        %496 = vmatprep.subr.mxu0 0.0
        %497 = vmatpush1.msra.mxu0 0.0
        %498 = vmatprep.subr.mxu0 0.0
        %499 = vmatpush1.msra.mxu0 0.0
        %500 = vmatprep.subr.mxu0 0.0
        %501 = vmatpush1.msra.mxu0 0.0
        %502 = vmatprep.subr.mxu0 0.0
        %503 = vmatpush1.msra.mxu0 0.0
        %504 = vmatprep.subr.mxu0 0.0
        %505 = vmatpush1.msra.mxu0 0.0
        %506 = vmatprep.subr.mxu0 0.0
        %507 = vmatpush1.msra.mxu0 0.0
        %508 = vmatprep.subr.mxu0 0.0
        %509 = vmatpush1.msra.mxu0 0.0
        %510 = vmatprep.subr.mxu0 0.0
        %511 = vmatpush1.msra.mxu0 0.0
        %512 = vmatprep.subr.mxu0 0.0
        %513 = vmatpush1.msra.mxu0 0.0
        %514 = vmatprep.subr.mxu0 0.0
        %515 = vmatpush1.msra.mxu0 0.0
        %516 = vmatprep.subr.mxu0 0.0
        %517 = vmatpush1.msra.mxu0 0.0
        %518 = vmatprep.subr.mxu0 0.0
        %519 = vmatpush1.msra.mxu0 0.0
        %520 = vmatprep.subr.mxu0 0.0
        %521 = vmatpush1.msra.mxu0 0.0
        %522 = vmatprep.subr.mxu0 0.0
        %523 = vmatpush1.msra.mxu0 0.0
        %524 = vmatprep.mubr.f32.mxu0 0.0
        %v525 = vand.u32 %v359, 4294901760
        %526 = vmatmul.mubr.f32.gmra.mrb[0].mxu0 %v525
        %v527 = vpop.f32.mrb[0].mxu0
        %v528 = vadd.f32 %v437, %v527
        %v529 = vpop.f32.mrb[0].mxu0
        %530 = vdwg.mxu0
        %531 = vmatprep.subr.mxu0 0.0
        %v532 = vand.u32 %v346, 4294901760
        %v533 = vsub.f32 %v346, %v532
        %534 = vmatpush1.msra.mxu0 %v533
        %535 = vmatprep.subr.mxu0 0.0
        %v536 = vand.u32 %v347, 4294901760
        %v537 = vsub.f32 %v347, %v536
        %538 = vmatpush1.msra.mxu0 %v537
        %539 = vmatprep.subr.mxu0 0.0
        %v540 = vand.u32 %v348, 4294901760
        %v541 = vsub.f32 %v348, %v540
        %542 = vmatpush1.msra.mxu0 %v541
        %543 = vmatprep.subr.mxu0 0.0
        %v544 = vand.u32 %v349, 4294901760
        %v545 = vsub.f32 %v349, %v544
        %546 = vmatpush1.msra.mxu0 %v545
        %547 = vmatprep.subr.mxu0 0.0
        %548 = vmatpush1.msra.mxu0 0.0
        %549 = vmatprep.subr.mxu0 0.0
        %550 = vmatpush1.msra.mxu0 0.0
        %551 = vmatprep.subr.mxu0 0.0
        %552 = vmatpush1.msra.mxu0 0.0
        %553 = vmatprep.subr.mxu0 0.0
        %554 = vmatpush1.msra.mxu0 0.0
        %555 = vmatprep.subr.mxu0 0.0
        %556 = vmatpush1.msra.mxu0 0.0
        %557 = vmatprep.subr.mxu0 0.0
        %558 = vmatpush1.msra.mxu0 0.0
        %559 = vmatprep.subr.mxu0 0.0
        %560 = vmatpush1.msra.mxu0 0.0
        %561 = vmatprep.subr.mxu0 0.0
        %562 = vmatpush1.msra.mxu0 0.0
        %563 = vmatprep.subr.mxu0 0.0
        %564 = vmatpush1.msra.mxu0 0.0
        %565 = vmatprep.subr.mxu0 0.0
        %566 = vmatpush1.msra.mxu0 0.0
        %567 = vmatprep.subr.mxu0 0.0
        %568 = vmatpush1.msra.mxu0 0.0
        %569 = vmatprep.subr.mxu0 0.0
        %570 = vmatpush1.msra.mxu0 0.0
        %571 = vmatprep.subr.mxu0 0.0
        %572 = vmatpush1.msra.mxu0 0.0
        %573 = vmatprep.subr.mxu0 0.0
        %574 = vmatpush1.msra.mxu0 0.0
        %575 = vmatprep.subr.mxu0 0.0
        %576 = vmatpush1.msra.mxu0 0.0
        %577 = vmatprep.subr.mxu0 0.0
        %578 = vmatpush1.msra.mxu0 0.0
        %579 = vmatprep.subr.mxu0 0.0
        %580 = vmatpush1.msra.mxu0 0.0
        %581 = vmatprep.subr.mxu0 0.0
        %582 = vmatpush1.msra.mxu0 0.0
        %583 = vmatprep.subr.mxu0 0.0
        %584 = vmatpush1.msra.mxu0 0.0
        %585 = vmatprep.subr.mxu0 0.0
        %586 = vmatpush1.msra.mxu0 0.0
        %587 = vmatprep.subr.mxu0 0.0
        %588 = vmatpush1.msra.mxu0 0.0
        %589 = vmatprep.subr.mxu0 0.0
        %590 = vmatpush1.msra.mxu0 0.0
        %591 = vmatprep.subr.mxu0 0.0
        %592 = vmatpush1.msra.mxu0 0.0
        %593 = vmatprep.subr.mxu0 0.0
        %594 = vmatpush1.msra.mxu0 0.0
        %595 = vmatprep.subr.mxu0 0.0
        %596 = vmatpush1.msra.mxu0 0.0
        %597 = vmatprep.subr.mxu0 0.0
        %598 = vmatpush1.msra.mxu0 0.0
        %599 = vmatprep.subr.mxu0 0.0
        %600 = vmatpush1.msra.mxu0 0.0
        %601 = vmatprep.subr.mxu0 0.0
        %602 = vmatpush1.msra.mxu0 0.0
        %603 = vmatprep.mubr.f32.mxu0 0.0
        %v604 = vand.u32 %v359, 4294901760
        %v605 = vsub.f32 %v359, %v604
        %606 = vmatmul.mubr.f32.gmra.mrb[0].mxu0 %v605
        %v607 = vpop.f32.mrb[0].mxu0
        %v608 = vadd.f32 %v528, %v607
        %v609 = vpop.f32.mrb[0].mxu0
        %610 = vdwg.mxu0
        %611 = vmatprep.subr.mxu0 0.0
        %v612 = vand.u32 %v346, 4294901760
        %613 = vmatpush1.msra.mxu0 %v612
        %614 = vmatprep.subr.mxu0 0.0
        %v615 = vand.u32 %v347, 4294901760
        %616 = vmatpush1.msra.mxu0 %v615
        %617 = vmatprep.subr.mxu0 0.0
        %v618 = vand.u32 %v348, 4294901760
        %619 = vmatpush1.msra.mxu0 %v618
        %620 = vmatprep.subr.mxu0 0.0
        %v621 = vand.u32 %v349, 4294901760
        %622 = vmatpush1.msra.mxu0 %v621
        %623 = vmatprep.subr.mxu0 0.0
        %624 = vmatpush1.msra.mxu0 0.0
        %625 = vmatprep.subr.mxu0 0.0
        %626 = vmatpush1.msra.mxu0 0.0
        %627 = vmatprep.subr.mxu0 0.0
        %628 = vmatpush1.msra.mxu0 0.0
        %629 = vmatprep.subr.mxu0 0.0
        %630 = vmatpush1.msra.mxu0 0.0
        %631 = vmatprep.subr.mxu0 0.0
        %632 = vmatpush1.msra.mxu0 0.0
        %633 = vmatprep.subr.mxu0 0.0
        %634 = vmatpush1.msra.mxu0 0.0
        %635 = vmatprep.subr.mxu0 0.0
        %636 = vmatpush1.msra.mxu0 0.0
        %637 = vmatprep.subr.mxu0 0.0
        %638 = vmatpush1.msra.mxu0 0.0
        %639 = vmatprep.subr.mxu0 0.0
        %640 = vmatpush1.msra.mxu0 0.0
        %641 = vmatprep.subr.mxu0 0.0
        %642 = vmatpush1.msra.mxu0 0.0
        %643 = vmatprep.subr.mxu0 0.0
        %644 = vmatpush1.msra.mxu0 0.0
        %645 = vmatprep.subr.mxu0 0.0
        %646 = vmatpush1.msra.mxu0 0.0
        %647 = vmatprep.subr.mxu0 0.0
        %648 = vmatpush1.msra.mxu0 0.0
        %649 = vmatprep.subr.mxu0 0.0
        %650 = vmatpush1.msra.mxu0 0.0
        %651 = vmatprep.subr.mxu0 0.0
        %652 = vmatpush1.msra.mxu0 0.0
        %653 = vmatprep.subr.mxu0 0.0
        %654 = vmatpush1.msra.mxu0 0.0
        %655 = vmatprep.subr.mxu0 0.0
        %656 = vmatpush1.msra.mxu0 0.0
        %657 = vmatprep.subr.mxu0 0.0
        %658 = vmatpush1.msra.mxu0 0.0
        %659 = vmatprep.subr.mxu0 0.0
        %660 = vmatpush1.msra.mxu0 0.0
        %661 = vmatprep.subr.mxu0 0.0
        %662 = vmatpush1.msra.mxu0 0.0
        %663 = vmatprep.subr.mxu0 0.0
        %664 = vmatpush1.msra.mxu0 0.0
        %665 = vmatprep.subr.mxu0 0.0
        %666 = vmatpush1.msra.mxu0 0.0
        %667 = vmatprep.subr.mxu0 0.0
        %668 = vmatpush1.msra.mxu0 0.0
        %669 = vmatprep.subr.mxu0 0.0
        %670 = vmatpush1.msra.mxu0 0.0
        %671 = vmatprep.subr.mxu0 0.0
        %672 = vmatpush1.msra.mxu0 0.0
        %673 = vmatprep.subr.mxu0 0.0
        %674 = vmatpush1.msra.mxu0 0.0
        %675 = vmatprep.subr.mxu0 0.0
        %676 = vmatpush1.msra.mxu0 0.0
        %677 = vmatprep.subr.mxu0 0.0
        %678 = vmatpush1.msra.mxu0 0.0
        %679 = vmatprep.mubr.f32.mxu0 0.0
        %v680 = vand.u32 %v359, 4294901760
        %v681 = vsub.f32 %v359, %v680
        %v682 = vand.u32 %v681, 4294901760
        %683 = vmatmul.mubr.f32.gmra.mrb[0].mxu0 %v682
        %v684 = vpop.f32.mrb[0].mxu0
        %v685 = vadd.f32 %v608, %v684
        %v686 = vpop.f32.mrb[0].mxu0
        %687 = vdwg.mxu0
        %688 = vmatprep.subr.mxu0 0.0
        %v689 = vand.u32 %v346, 4294901760
        %v690 = vsub.f32 %v346, %v689
        %v691 = vand.u32 %v690, 4294901760
        %692 = vmatpush1.msra.mxu0 %v691
        %693 = vmatprep.subr.mxu0 0.0
        %v694 = vand.u32 %v347, 4294901760
        %v695 = vsub.f32 %v347, %v694
        %v696 = vand.u32 %v695, 4294901760
        %697 = vmatpush1.msra.mxu0 %v696
        %698 = vmatprep.subr.mxu0 0.0
        %v699 = vand.u32 %v348, 4294901760
        %v700 = vsub.f32 %v348, %v699
        %v701 = vand.u32 %v700, 4294901760
        %702 = vmatpush1.msra.mxu0 %v701
        %703 = vmatprep.subr.mxu0 0.0
        %v704 = vand.u32 %v349, 4294901760
        %v705 = vsub.f32 %v349, %v704
        %v706 = vand.u32 %v705, 4294901760
        %707 = vmatpush1.msra.mxu0 %v706
        %708 = vmatprep.subr.mxu0 0.0
        %709 = vmatpush1.msra.mxu0 0.0
        %710 = vmatprep.subr.mxu0 0.0
        %711 = vmatpush1.msra.mxu0 0.0
        %712 = vmatprep.subr.mxu0 0.0
        %713 = vmatpush1.msra.mxu0 0.0
        %714 = vmatprep.subr.mxu0 0.0
        %715 = vmatpush1.msra.mxu0 0.0
        %716 = vmatprep.subr.mxu0 0.0
        %717 = vmatpush1.msra.mxu0 0.0
        %718 = vmatprep.subr.mxu0 0.0
        %719 = vmatpush1.msra.mxu0 0.0
        %720 = vmatprep.subr.mxu0 0.0
        %721 = vmatpush1.msra.mxu0 0.0
        %722 = vmatprep.subr.mxu0 0.0
        %723 = vmatpush1.msra.mxu0 0.0
        %724 = vmatprep.subr.mxu0 0.0
        %725 = vmatpush1.msra.mxu0 0.0
        %726 = vmatprep.subr.mxu0 0.0
        %727 = vmatpush1.msra.mxu0 0.0
        %728 = vmatprep.subr.mxu0 0.0
        %729 = vmatpush1.msra.mxu0 0.0
        %730 = vmatprep.subr.mxu0 0.0
        %731 = vmatpush1.msra.mxu0 0.0
        %732 = vmatprep.subr.mxu0 0.0
        %733 = vmatpush1.msra.mxu0 0.0
        %734 = vmatprep.subr.mxu0 0.0
        %735 = vmatpush1.msra.mxu0 0.0
        %736 = vmatprep.subr.mxu0 0.0
        %737 = vmatpush1.msra.mxu0 0.0
        %738 = vmatprep.subr.mxu0 0.0
        %739 = vmatpush1.msra.mxu0 0.0
        %740 = vmatprep.subr.mxu0 0.0
        %741 = vmatpush1.msra.mxu0 0.0
        %742 = vmatprep.subr.mxu0 0.0
        %743 = vmatpush1.msra.mxu0 0.0
        %744 = vmatprep.subr.mxu0 0.0
        %745 = vmatpush1.msra.mxu0 0.0
        %746 = vmatprep.subr.mxu0 0.0
        %747 = vmatpush1.msra.mxu0 0.0
        %748 = vmatprep.subr.mxu0 0.0
        %749 = vmatpush1.msra.mxu0 0.0
        %750 = vmatprep.subr.mxu0 0.0
        %751 = vmatpush1.msra.mxu0 0.0
        %752 = vmatprep.subr.mxu0 0.0
        %753 = vmatpush1.msra.mxu0 0.0
        %754 = vmatprep.subr.mxu0 0.0
        %755 = vmatpush1.msra.mxu0 0.0
        %756 = vmatprep.subr.mxu0 0.0
        %757 = vmatpush1.msra.mxu0 0.0
        %758 = vmatprep.subr.mxu0 0.0
        %759 = vmatpush1.msra.mxu0 0.0
        %760 = vmatprep.subr.mxu0 0.0
        %761 = vmatpush1.msra.mxu0 0.0
        %762 = vmatprep.subr.mxu0 0.0
        %763 = vmatpush1.msra.mxu0 0.0
        %764 = vmatprep.mubr.f32.mxu0 0.0
        %v765 = vand.u32 %v359, 4294901760
        %766 = vmatmul.mubr.f32.gmra.mrb[0].mxu0 %v765
        %v767 = vpop.f32.mrb[0].mxu0
        %v768 = vadd.f32 %v685, %v767
        %v769 = vpop.f32.mrb[0].mxu0
        %770 = vdwg.mxu0
        %771 = vmatprep.subr.mxu0 0.0
        %v772 = vand.u32 %v346, 4294901760
        %773 = vmatpush1.msra.mxu0 %v772
        %774 = vmatprep.subr.mxu0 0.0
        %v775 = vand.u32 %v347, 4294901760
        %776 = vmatpush1.msra.mxu0 %v775
        %777 = vmatprep.subr.mxu0 0.0
        %v778 = vand.u32 %v348, 4294901760
        %779 = vmatpush1.msra.mxu0 %v778
        %780 = vmatprep.subr.mxu0 0.0
        %v781 = vand.u32 %v349, 4294901760
        %782 = vmatpush1.msra.mxu0 %v781
        %783 = vmatprep.subr.mxu0 0.0
        %784 = vmatpush1.msra.mxu0 0.0
        %785 = vmatprep.subr.mxu0 0.0
        %786 = vmatpush1.msra.mxu0 0.0
        %787 = vmatprep.subr.mxu0 0.0
        %788 = vmatpush1.msra.mxu0 0.0
        %789 = vmatprep.subr.mxu0 0.0
        %790 = vmatpush1.msra.mxu0 0.0
        %791 = vmatprep.subr.mxu0 0.0
        %792 = vmatpush1.msra.mxu0 0.0
        %793 = vmatprep.subr.mxu0 0.0
        %794 = vmatpush1.msra.mxu0 0.0
        %795 = vmatprep.subr.mxu0 0.0
        %796 = vmatpush1.msra.mxu0 0.0
        %797 = vmatprep.subr.mxu0 0.0
        %798 = vmatpush1.msra.mxu0 0.0
        %799 = vmatprep.subr.mxu0 0.0
        %800 = vmatpush1.msra.mxu0 0.0
        %801 = vmatprep.subr.mxu0 0.0
        %802 = vmatpush1.msra.mxu0 0.0
        %803 = vmatprep.subr.mxu0 0.0
        %804 = vmatpush1.msra.mxu0 0.0
        %805 = vmatprep.subr.mxu0 0.0
        %806 = vmatpush1.msra.mxu0 0.0
        %807 = vmatprep.subr.mxu0 0.0
        %808 = vmatpush1.msra.mxu0 0.0
        %809 = vmatprep.subr.mxu0 0.0
        %810 = vmatpush1.msra.mxu0 0.0
        %811 = vmatprep.subr.mxu0 0.0
        %812 = vmatpush1.msra.mxu0 0.0
        %813 = vmatprep.subr.mxu0 0.0
        %814 = vmatpush1.msra.mxu0 0.0
        %815 = vmatprep.subr.mxu0 0.0
        %816 = vmatpush1.msra.mxu0 0.0
        %817 = vmatprep.subr.mxu0 0.0
        %818 = vmatpush1.msra.mxu0 0.0
        %819 = vmatprep.subr.mxu0 0.0
        %820 = vmatpush1.msra.mxu0 0.0
        %821 = vmatprep.subr.mxu0 0.0
        %822 = vmatpush1.msra.mxu0 0.0
        %823 = vmatprep.subr.mxu0 0.0
        %824 = vmatpush1.msra.mxu0 0.0
        %825 = vmatprep.subr.mxu0 0.0
        %826 = vmatpush1.msra.mxu0 0.0
        %827 = vmatprep.subr.mxu0 0.0
        %828 = vmatpush1.msra.mxu0 0.0
        %829 = vmatprep.subr.mxu0 0.0
        %830 = vmatpush1.msra.mxu0 0.0
        %831 = vmatprep.subr.mxu0 0.0
        %832 = vmatpush1.msra.mxu0 0.0
        %833 = vmatprep.subr.mxu0 0.0
        %834 = vmatpush1.msra.mxu0 0.0
        %835 = vmatprep.subr.mxu0 0.0
        %836 = vmatpush1.msra.mxu0 0.0
        %837 = vmatprep.subr.mxu0 0.0
        %838 = vmatpush1.msra.mxu0 0.0
        %839 = vmatprep.mubr.f32.mxu0 0.0
        %v840 = vand.u32 %v359, 4294901760
        %841 = vmatmul.mubr.f32.gmra.mrb[0].mxu0 %v840
        %v842 = vpop.f32.mrb[0].mxu0
        %v843 = vadd.f32 %v768, %v842
        %v844 = vpop.f32.mrb[0].mxu0
        %845 = vdwg.mxu0
        %v846 = vld [vmem:[#allocation8] sm:$0xff]
        %v847 = vld [vmem:[#allocation8 + $0x8] sm:$0xff]
        %v848 = vld [vmem:[#allocation8 + $0x10] sm:$0xff]
        %v849 = vld [vmem:[#allocation8 + $0x18] sm:$0xff]
        %v851 = vsel %vm357, %v843, 0
        %853 = vmatprep.subr.mxu0 0.0
        %v854 = vand.u32 %v846, 4294901760
        %855 = vmatpush1.msra.mxu0 %v854
        %856 = vmatprep.subr.mxu0 0.0
        %v857 = vand.u32 %v847, 4294901760
        %858 = vmatpush1.msra.mxu0 %v857
        %859 = vmatprep.subr.mxu0 0.0
        %v860 = vand.u32 %v848, 4294901760
        %861 = vmatpush1.msra.mxu0 %v860
        %862 = vmatprep.subr.mxu0 0.0
        %v863 = vand.u32 %v849, 4294901760
        %864 = vmatpush1.msra.mxu0 %v863
        %865 = vmatprep.subr.mxu0 0.0
        %866 = vmatpush1.msra.mxu0 0.0
        %867 = vmatprep.subr.mxu0 0.0
        %868 = vmatpush1.msra.mxu0 0.0
        %869 = vmatprep.subr.mxu0 0.0
        %870 = vmatpush1.msra.mxu0 0.0
        %871 = vmatprep.subr.mxu0 0.0
        %872 = vmatpush1.msra.mxu0 0.0
        %873 = vmatprep.subr.mxu0 0.0
        %874 = vmatpush1.msra.mxu0 0.0
        %875 = vmatprep.subr.mxu0 0.0
        %876 = vmatpush1.msra.mxu0 0.0
        %877 = vmatprep.subr.mxu0 0.0
        %878 = vmatpush1.msra.mxu0 0.0
        %879 = vmatprep.subr.mxu0 0.0
        %880 = vmatpush1.msra.mxu0 0.0
        %881 = vmatprep.subr.mxu0 0.0
        %882 = vmatpush1.msra.mxu0 0.0
        %883 = vmatprep.subr.mxu0 0.0
        %884 = vmatpush1.msra.mxu0 0.0
        %885 = vmatprep.subr.mxu0 0.0
        %886 = vmatpush1.msra.mxu0 0.0
        %887 = vmatprep.subr.mxu0 0.0
        %888 = vmatpush1.msra.mxu0 0.0
        %889 = vmatprep.subr.mxu0 0.0
        %890 = vmatpush1.msra.mxu0 0.0
        %891 = vmatprep.subr.mxu0 0.0
        %892 = vmatpush1.msra.mxu0 0.0
        %893 = vmatprep.subr.mxu0 0.0
        %894 = vmatpush1.msra.mxu0 0.0
        %895 = vmatprep.subr.mxu0 0.0
        %896 = vmatpush1.msra.mxu0 0.0
        %897 = vmatprep.subr.mxu0 0.0
        %898 = vmatpush1.msra.mxu0 0.0
        %899 = vmatprep.subr.mxu0 0.0
        %900 = vmatpush1.msra.mxu0 0.0
        %901 = vmatprep.subr.mxu0 0.0
        %902 = vmatpush1.msra.mxu0 0.0
        %903 = vmatprep.subr.mxu0 0.0
        %904 = vmatpush1.msra.mxu0 0.0
        %905 = vmatprep.subr.mxu0 0.0
        %906 = vmatpush1.msra.mxu0 0.0
        %907 = vmatprep.subr.mxu0 0.0
        %908 = vmatpush1.msra.mxu0 0.0
        %909 = vmatprep.subr.mxu0 0.0
        %910 = vmatpush1.msra.mxu0 0.0
        %911 = vmatprep.subr.mxu0 0.0
        %912 = vmatpush1.msra.mxu0 0.0
        %913 = vmatprep.subr.mxu0 0.0
        %914 = vmatpush1.msra.mxu0 0.0
        %915 = vmatprep.subr.mxu0 0.0
        %916 = vmatpush1.msra.mxu0 0.0
        %917 = vmatprep.subr.mxu0 0.0
        %918 = vmatpush1.msra.mxu0 0.0
        %919 = vmatprep.subr.mxu0 0.0
        %920 = vmatpush1.msra.mxu0 0.0
        %921 = vmatprep.mubr.f32.mxu0 0.0
        %v922 = vand.u32 %v851, 4294901760
        %v923 = vsub.f32 %v851, %v922
        %v924 = vand.u32 %v923, 4294901760
        %v925 = vsub.f32 %v923, %v924
        %v926 = vand.u32 %v925, 4294901760
        %927 = vmatmul.mubr.f32.gmra.mrb[0].mxu0 %v926
        %v928 = vpop.f32.mrb[0].mxu0
        %v929 = vadd.f32 0.0, %v928
        %v930 = vpop.f32.mrb[0].mxu0
        %931 = vdwg.mxu0
        %932 = vmatprep.subr.mxu0 0.0
        %v933 = vand.u32 %v846, 4294901760
        %v934 = vsub.f32 %v846, %v933
        %v935 = vand.u32 %v934, 4294901760
        %v936 = vsub.f32 %v934, %v935
        %v937 = vand.u32 %v936, 4294901760
        %938 = vmatpush1.msra.mxu0 %v937
        %939 = vmatprep.subr.mxu0 0.0
        %v940 = vand.u32 %v847, 4294901760
        %v941 = vsub.f32 %v847, %v940
        %v942 = vand.u32 %v941, 4294901760
        %v943 = vsub.f32 %v941, %v942
        %v944 = vand.u32 %v943, 4294901760
        %945 = vmatpush1.msra.mxu0 %v944
        %946 = vmatprep.subr.mxu0 0.0
        %v947 = vand.u32 %v848, 4294901760
        %v948 = vsub.f32 %v848, %v947
        %v949 = vand.u32 %v948, 4294901760
        %v950 = vsub.f32 %v948, %v949
        %v951 = vand.u32 %v950, 4294901760
        %952 = vmatpush1.msra.mxu0 %v951
        %953 = vmatprep.subr.mxu0 0.0
        %v954 = vand.u32 %v849, 4294901760
        %v955 = vsub.f32 %v849, %v954
        %v956 = vand.u32 %v955, 4294901760
        %v957 = vsub.f32 %v955, %v956
        %v958 = vand.u32 %v957, 4294901760
        %959 = vmatpush1.msra.mxu0 %v958
        %960 = vmatprep.subr.mxu0 0.0
        %961 = vmatpush1.msra.mxu0 0.0
        %962 = vmatprep.subr.mxu0 0.0
        %963 = vmatpush1.msra.mxu0 0.0
        %964 = vmatprep.subr.mxu0 0.0
        %965 = vmatpush1.msra.mxu0 0.0
        %966 = vmatprep.subr.mxu0 0.0
        %967 = vmatpush1.msra.mxu0 0.0
        %968 = vmatprep.subr.mxu0 0.0
        %969 = vmatpush1.msra.mxu0 0.0
        %970 = vmatprep.subr.mxu0 0.0
        %971 = vmatpush1.msra.mxu0 0.0
        %972 = vmatprep.subr.mxu0 0.0
        %973 = vmatpush1.msra.mxu0 0.0
        %974 = vmatprep.subr.mxu0 0.0
        %975 = vmatpush1.msra.mxu0 0.0
        %976 = vmatprep.subr.mxu0 0.0
        %977 = vmatpush1.msra.mxu0 0.0
        %978 = vmatprep.subr.mxu0 0.0
        %979 = vmatpush1.msra.mxu0 0.0
        %980 = vmatprep.subr.mxu0 0.0
        %981 = vmatpush1.msra.mxu0 0.0
        %982 = vmatprep.subr.mxu0 0.0
        %983 = vmatpush1.msra.mxu0 0.0
        %984 = vmatprep.subr.mxu0 0.0
        %985 = vmatpush1.msra.mxu0 0.0
        %986 = vmatprep.subr.mxu0 0.0
        %987 = vmatpush1.msra.mxu0 0.0
        %988 = vmatprep.subr.mxu0 0.0
        %989 = vmatpush1.msra.mxu0 0.0
        %990 = vmatprep.subr.mxu0 0.0
        %991 = vmatpush1.msra.mxu0 0.0
        %992 = vmatprep.subr.mxu0 0.0
        %993 = vmatpush1.msra.mxu0 0.0
        %994 = vmatprep.subr.mxu0 0.0
        %995 = vmatpush1.msra.mxu0 0.0
        %996 = vmatprep.subr.mxu0 0.0
        %997 = vmatpush1.msra.mxu0 0.0
        %998 = vmatprep.subr.mxu0 0.0
        %999 = vmatpush1.msra.mxu0 0.0
        %1000 = vmatprep.subr.mxu0 0.0
        %1001 = vmatpush1.msra.mxu0 0.0
        %1002 = vmatprep.subr.mxu0 0.0
        %1003 = vmatpush1.msra.mxu0 0.0
        %1004 = vmatprep.subr.mxu0 0.0
        %1005 = vmatpush1.msra.mxu0 0.0
        %1006 = vmatprep.subr.mxu0 0.0
        %1007 = vmatpush1.msra.mxu0 0.0
        %1008 = vmatprep.subr.mxu0 0.0
        %1009 = vmatpush1.msra.mxu0 0.0
        %1010 = vmatprep.subr.mxu0 0.0
        %1011 = vmatpush1.msra.mxu0 0.0
        %1012 = vmatprep.subr.mxu0 0.0
        %1013 = vmatpush1.msra.mxu0 0.0
        %1014 = vmatprep.subr.mxu0 0.0
        %1015 = vmatpush1.msra.mxu0 0.0
        %1016 = vmatprep.mubr.f32.mxu0 0.0
        %v1017 = vand.u32 %v851, 4294901760
        %1018 = vmatmul.mubr.f32.gmra.mrb[0].mxu0 %v1017
        %v1019 = vpop.f32.mrb[0].mxu0
        %v1020 = vadd.f32 %v929, %v1019
        %v1021 = vpop.f32.mrb[0].mxu0
        %1022 = vdwg.mxu0
        %1023 = vmatprep.subr.mxu0 0.0
        %v1024 = vand.u32 %v846, 4294901760
        %v1025 = vsub.f32 %v846, %v1024
        %1026 = vmatpush1.msra.mxu0 %v1025
        %1027 = vmatprep.subr.mxu0 0.0
        %v1028 = vand.u32 %v847, 4294901760
        %v1029 = vsub.f32 %v847, %v1028
        %1030 = vmatpush1.msra.mxu0 %v1029
        %1031 = vmatprep.subr.mxu0 0.0
        %v1032 = vand.u32 %v848, 4294901760
        %v1033 = vsub.f32 %v848, %v1032
        %1034 = vmatpush1.msra.mxu0 %v1033
        %1035 = vmatprep.subr.mxu0 0.0
        %v1036 = vand.u32 %v849, 4294901760
        %v1037 = vsub.f32 %v849, %v1036
        %1038 = vmatpush1.msra.mxu0 %v1037
        %1039 = vmatprep.subr.mxu0 0.0
        %1040 = vmatpush1.msra.mxu0 0.0
        %1041 = vmatprep.subr.mxu0 0.0
        %1042 = vmatpush1.msra.mxu0 0.0
        %1043 = vmatprep.subr.mxu0 0.0
        %1044 = vmatpush1.msra.mxu0 0.0
        %1045 = vmatprep.subr.mxu0 0.0
        %1046 = vmatpush1.msra.mxu0 0.0
        %1047 = vmatprep.subr.mxu0 0.0
        %1048 = vmatpush1.msra.mxu0 0.0
        %1049 = vmatprep.subr.mxu0 0.0
        %1050 = vmatpush1.msra.mxu0 0.0
        %1051 = vmatprep.subr.mxu0 0.0
        %1052 = vmatpush1.msra.mxu0 0.0
        %1053 = vmatprep.subr.mxu0 0.0
        %1054 = vmatpush1.msra.mxu0 0.0
        %1055 = vmatprep.subr.mxu0 0.0
        %1056 = vmatpush1.msra.mxu0 0.0
        %1057 = vmatprep.subr.mxu0 0.0
        %1058 = vmatpush1.msra.mxu0 0.0
        %1059 = vmatprep.subr.mxu0 0.0
        %1060 = vmatpush1.msra.mxu0 0.0
        %1061 = vmatprep.subr.mxu0 0.0
        %1062 = vmatpush1.msra.mxu0 0.0
        %1063 = vmatprep.subr.mxu0 0.0
        %1064 = vmatpush1.msra.mxu0 0.0
        %1065 = vmatprep.subr.mxu0 0.0
        %1066 = vmatpush1.msra.mxu0 0.0
        %1067 = vmatprep.subr.mxu0 0.0
        %1068 = vmatpush1.msra.mxu0 0.0
        %1069 = vmatprep.subr.mxu0 0.0
        %1070 = vmatpush1.msra.mxu0 0.0
        %1071 = vmatprep.subr.mxu0 0.0
        %1072 = vmatpush1.msra.mxu0 0.0
        %1073 = vmatprep.subr.mxu0 0.0
        %1074 = vmatpush1.msra.mxu0 0.0
        %1075 = vmatprep.subr.mxu0 0.0
        %1076 = vmatpush1.msra.mxu0 0.0
        %1077 = vmatprep.subr.mxu0 0.0
        %1078 = vmatpush1.msra.mxu0 0.0
        %1079 = vmatprep.subr.mxu0 0.0
        %1080 = vmatpush1.msra.mxu0 0.0
        %1081 = vmatprep.subr.mxu0 0.0
        %1082 = vmatpush1.msra.mxu0 0.0
        %1083 = vmatprep.subr.mxu0 0.0
        %1084 = vmatpush1.msra.mxu0 0.0
        %1085 = vmatprep.subr.mxu0 0.0
        %1086 = vmatpush1.msra.mxu0 0.0
        %1087 = vmatprep.subr.mxu0 0.0
        %1088 = vmatpush1.msra.mxu0 0.0
        %1089 = vmatprep.subr.mxu0 0.0
        %1090 = vmatpush1.msra.mxu0 0.0
        %1091 = vmatprep.subr.mxu0 0.0
        %1092 = vmatpush1.msra.mxu0 0.0
        %1093 = vmatprep.subr.mxu0 0.0
        %1094 = vmatpush1.msra.mxu0 0.0
        %1095 = vmatprep.mubr.f32.mxu0 0.0
        %v1096 = vand.u32 %v851, 4294901760
        %v1097 = vsub.f32 %v851, %v1096
        %1098 = vmatmul.mubr.f32.gmra.mrb[0].mxu0 %v1097
        %v1099 = vpop.f32.mrb[0].mxu0
        %v1100 = vadd.f32 %v1020, %v1099
        %v1101 = vpop.f32.mrb[0].mxu0
        %1102 = vdwg.mxu0
        %1103 = vmatprep.subr.mxu0 0.0
        %v1104 = vand.u32 %v846, 4294901760
        %1105 = vmatpush1.msra.mxu0 %v1104
        %1106 = vmatprep.subr.mxu0 0.0
        %v1107 = vand.u32 %v847, 4294901760
        %1108 = vmatpush1.msra.mxu0 %v1107
        %1109 = vmatprep.subr.mxu0 0.0
        %v1110 = vand.u32 %v848, 4294901760
        %1111 = vmatpush1.msra.mxu0 %v1110
        %1112 = vmatprep.subr.mxu0 0.0
        %v1113 = vand.u32 %v849, 4294901760
        %1114 = vmatpush1.msra.mxu0 %v1113
        %1115 = vmatprep.subr.mxu0 0.0
        %1116 = vmatpush1.msra.mxu0 0.0
        %1117 = vmatprep.subr.mxu0 0.0
        %1118 = vmatpush1.msra.mxu0 0.0
        %1119 = vmatprep.subr.mxu0 0.0
        %1120 = vmatpush1.msra.mxu0 0.0
        %1121 = vmatprep.subr.mxu0 0.0
        %1122 = vmatpush1.msra.mxu0 0.0
        %1123 = vmatprep.subr.mxu0 0.0
        %1124 = vmatpush1.msra.mxu0 0.0
        %1125 = vmatprep.subr.mxu0 0.0
        %1126 = vmatpush1.msra.mxu0 0.0
        %1127 = vmatprep.subr.mxu0 0.0
        %1128 = vmatpush1.msra.mxu0 0.0
        %1129 = vmatprep.subr.mxu0 0.0
        %1130 = vmatpush1.msra.mxu0 0.0
        %1131 = vmatprep.subr.mxu0 0.0
        %1132 = vmatpush1.msra.mxu0 0.0
        %1133 = vmatprep.subr.mxu0 0.0
        %1134 = vmatpush1.msra.mxu0 0.0
        %1135 = vmatprep.subr.mxu0 0.0
        %1136 = vmatpush1.msra.mxu0 0.0
        %1137 = vmatprep.subr.mxu0 0.0
        %1138 = vmatpush1.msra.mxu0 0.0
        %1139 = vmatprep.subr.mxu0 0.0
        %1140 = vmatpush1.msra.mxu0 0.0
        %1141 = vmatprep.subr.mxu0 0.0
        %1142 = vmatpush1.msra.mxu0 0.0
        %1143 = vmatprep.subr.mxu0 0.0
        %1144 = vmatpush1.msra.mxu0 0.0
        %1145 = vmatprep.subr.mxu0 0.0
        %1146 = vmatpush1.msra.mxu0 0.0
        %1147 = vmatprep.subr.mxu0 0.0
        %1148 = vmatpush1.msra.mxu0 0.0
        %1149 = vmatprep.subr.mxu0 0.0
        %1150 = vmatpush1.msra.mxu0 0.0
        %1151 = vmatprep.subr.mxu0 0.0
        %1152 = vmatpush1.msra.mxu0 0.0
        %1153 = vmatprep.subr.mxu0 0.0
        %1154 = vmatpush1.msra.mxu0 0.0
        %1155 = vmatprep.subr.mxu0 0.0
        %1156 = vmatpush1.msra.mxu0 0.0
        %1157 = vmatprep.subr.mxu0 0.0
        %1158 = vmatpush1.msra.mxu0 0.0
        %1159 = vmatprep.subr.mxu0 0.0
        %1160 = vmatpush1.msra.mxu0 0.0
        %1161 = vmatprep.subr.mxu0 0.0
        %1162 = vmatpush1.msra.mxu0 0.0
        %1163 = vmatprep.subr.mxu0 0.0
        %1164 = vmatpush1.msra.mxu0 0.0
        %1165 = vmatprep.subr.mxu0 0.0
        %1166 = vmatpush1.msra.mxu0 0.0
        %1167 = vmatprep.subr.mxu0 0.0
        %1168 = vmatpush1.msra.mxu0 0.0
        %1169 = vmatprep.subr.mxu0 0.0
        %1170 = vmatpush1.msra.mxu0 0.0
        %1171 = vmatprep.mubr.f32.mxu0 0.0
        %v1172 = vand.u32 %v851, 4294901760
        %v1173 = vsub.f32 %v851, %v1172
        %v1174 = vand.u32 %v1173, 4294901760
        %1175 = vmatmul.mubr.f32.gmra.mrb[0].mxu0 %v1174
        %v1176 = vpop.f32.mrb[0].mxu0
        %v1177 = vadd.f32 %v1100, %v1176
        %v1178 = vpop.f32.mrb[0].mxu0
        %1179 = vdwg.mxu0
        %1180 = vmatprep.subr.mxu0 0.0
        %v1181 = vand.u32 %v846, 4294901760
        %v1182 = vsub.f32 %v846, %v1181
        %v1183 = vand.u32 %v1182, 4294901760
        %1184 = vmatpush1.msra.mxu0 %v1183
        %1185 = vmatprep.subr.mxu0 0.0
        %v1186 = vand.u32 %v847, 4294901760
        %v1187 = vsub.f32 %v847, %v1186
        %v1188 = vand.u32 %v1187, 4294901760
        %1189 = vmatpush1.msra.mxu0 %v1188
        %1190 = vmatprep.subr.mxu0 0.0
        %v1191 = vand.u32 %v848, 4294901760
        %v1192 = vsub.f32 %v848, %v1191
        %v1193 = vand.u32 %v1192, 4294901760
        %1194 = vmatpush1.msra.mxu0 %v1193
        %1195 = vmatprep.subr.mxu0 0.0
        %v1196 = vand.u32 %v849, 4294901760
        %v1197 = vsub.f32 %v849, %v1196
        %v1198 = vand.u32 %v1197, 4294901760
        %1199 = vmatpush1.msra.mxu0 %v1198
        %1200 = vmatprep.subr.mxu0 0.0
        %1201 = vmatpush1.msra.mxu0 0.0
        %1202 = vmatprep.subr.mxu0 0.0
        %1203 = vmatpush1.msra.mxu0 0.0
        %1204 = vmatprep.subr.mxu0 0.0
        %1205 = vmatpush1.msra.mxu0 0.0
        %1206 = vmatprep.subr.mxu0 0.0
        %1207 = vmatpush1.msra.mxu0 0.0
        %1208 = vmatprep.subr.mxu0 0.0
        %1209 = vmatpush1.msra.mxu0 0.0
        %1210 = vmatprep.subr.mxu0 0.0
        %1211 = vmatpush1.msra.mxu0 0.0
        %1212 = vmatprep.subr.mxu0 0.0
        %1213 = vmatpush1.msra.mxu0 0.0
        %1214 = vmatprep.subr.mxu0 0.0
        %1215 = vmatpush1.msra.mxu0 0.0
        %1216 = vmatprep.subr.mxu0 0.0
        %1217 = vmatpush1.msra.mxu0 0.0
        %1218 = vmatprep.subr.mxu0 0.0
        %1219 = vmatpush1.msra.mxu0 0.0
        %1220 = vmatprep.subr.mxu0 0.0
        %1221 = vmatpush1.msra.mxu0 0.0
        %1222 = vmatprep.subr.mxu0 0.0
        %1223 = vmatpush1.msra.mxu0 0.0
        %1224 = vmatprep.subr.mxu0 0.0
        %1225 = vmatpush1.msra.mxu0 0.0
        %1226 = vmatprep.subr.mxu0 0.0
        %1227 = vmatpush1.msra.mxu0 0.0
        %1228 = vmatprep.subr.mxu0 0.0
        %1229 = vmatpush1.msra.mxu0 0.0
        %1230 = vmatprep.subr.mxu0 0.0
        %1231 = vmatpush1.msra.mxu0 0.0
        %1232 = vmatprep.subr.mxu0 0.0
        %1233 = vmatpush1.msra.mxu0 0.0
        %1234 = vmatprep.subr.mxu0 0.0
        %1235 = vmatpush1.msra.mxu0 0.0
        %1236 = vmatprep.subr.mxu0 0.0
        %1237 = vmatpush1.msra.mxu0 0.0
        %1238 = vmatprep.subr.mxu0 0.0
        %1239 = vmatpush1.msra.mxu0 0.0
        %1240 = vmatprep.subr.mxu0 0.0
        %1241 = vmatpush1.msra.mxu0 0.0
        %1242 = vmatprep.subr.mxu0 0.0
        %1243 = vmatpush1.msra.mxu0 0.0
        %1244 = vmatprep.subr.mxu0 0.0
        %1245 = vmatpush1.msra.mxu0 0.0
        %1246 = vmatprep.subr.mxu0 0.0
        %1247 = vmatpush1.msra.mxu0 0.0
        %1248 = vmatprep.subr.mxu0 0.0
        %1249 = vmatpush1.msra.mxu0 0.0
        %1250 = vmatprep.subr.mxu0 0.0
        %1251 = vmatpush1.msra.mxu0 0.0
        %1252 = vmatprep.subr.mxu0 0.0
        %1253 = vmatpush1.msra.mxu0 0.0
        %1254 = vmatprep.subr.mxu0 0.0
        %1255 = vmatpush1.msra.mxu0 0.0
        %1256 = vmatprep.mubr.f32.mxu0 0.0
        %v1257 = vand.u32 %v851, 4294901760
        %1258 = vmatmul.mubr.f32.gmra.mrb[0].mxu0 %v1257
        %v1259 = vpop.f32.mrb[0].mxu0
        %v1260 = vadd.f32 %v1177, %v1259
        %v1261 = vpop.f32.mrb[0].mxu0
        %1262 = vdwg.mxu0
        %1263 = vmatprep.subr.mxu0 0.0
        %v1264 = vand.u32 %v846, 4294901760
        %1265 = vmatpush1.msra.mxu0 %v1264
        %1266 = vmatprep.subr.mxu0 0.0
        %v1267 = vand.u32 %v847, 4294901760
        %1268 = vmatpush1.msra.mxu0 %v1267
        %1269 = vmatprep.subr.mxu0 0.0
        %v1270 = vand.u32 %v848, 4294901760
        %1271 = vmatpush1.msra.mxu0 %v1270
        %1272 = vmatprep.subr.mxu0 0.0
        %v1273 = vand.u32 %v849, 4294901760
        %1274 = vmatpush1.msra.mxu0 %v1273
        %1275 = vmatprep.subr.mxu0 0.0
        %1276 = vmatpush1.msra.mxu0 0.0
        %1277 = vmatprep.subr.mxu0 0.0
        %1278 = vmatpush1.msra.mxu0 0.0
        %1279 = vmatprep.subr.mxu0 0.0
        %1280 = vmatpush1.msra.mxu0 0.0
        %1281 = vmatprep.subr.mxu0 0.0
        %1282 = vmatpush1.msra.mxu0 0.0
        %1283 = vmatprep.subr.mxu0 0.0
        %1284 = vmatpush1.msra.mxu0 0.0
        %1285 = vmatprep.subr.mxu0 0.0
        %1286 = vmatpush1.msra.mxu0 0.0
        %1287 = vmatprep.subr.mxu0 0.0
        %1288 = vmatpush1.msra.mxu0 0.0
        %1289 = vmatprep.subr.mxu0 0.0
        %1290 = vmatpush1.msra.mxu0 0.0
        %1291 = vmatprep.subr.mxu0 0.0
        %1292 = vmatpush1.msra.mxu0 0.0
        %1293 = vmatprep.subr.mxu0 0.0
        %1294 = vmatpush1.msra.mxu0 0.0
        %1295 = vmatprep.subr.mxu0 0.0
        %1296 = vmatpush1.msra.mxu0 0.0
        %1297 = vmatprep.subr.mxu0 0.0
        %1298 = vmatpush1.msra.mxu0 0.0
        %1299 = vmatprep.subr.mxu0 0.0
        %1300 = vmatpush1.msra.mxu0 0.0
        %1301 = vmatprep.subr.mxu0 0.0
        %1302 = vmatpush1.msra.mxu0 0.0
        %1303 = vmatprep.subr.mxu0 0.0
        %1304 = vmatpush1.msra.mxu0 0.0
        %1305 = vmatprep.subr.mxu0 0.0
        %1306 = vmatpush1.msra.mxu0 0.0
        %1307 = vmatprep.subr.mxu0 0.0
        %1308 = vmatpush1.msra.mxu0 0.0
        %1309 = vmatprep.subr.mxu0 0.0
        %1310 = vmatpush1.msra.mxu0 0.0
        %1311 = vmatprep.subr.mxu0 0.0
        %1312 = vmatpush1.msra.mxu0 0.0
        %1313 = vmatprep.subr.mxu0 0.0
        %1314 = vmatpush1.msra.mxu0 0.0
        %1315 = vmatprep.subr.mxu0 0.0
        %1316 = vmatpush1.msra.mxu0 0.0
        %1317 = vmatprep.subr.mxu0 0.0
        %1318 = vmatpush1.msra.mxu0 0.0
        %1319 = vmatprep.subr.mxu0 0.0
        %1320 = vmatpush1.msra.mxu0 0.0
        %1321 = vmatprep.subr.mxu0 0.0
        %1322 = vmatpush1.msra.mxu0 0.0
        %1323 = vmatprep.subr.mxu0 0.0
        %1324 = vmatpush1.msra.mxu0 0.0
        %1325 = vmatprep.subr.mxu0 0.0
        %1326 = vmatpush1.msra.mxu0 0.0
        %1327 = vmatprep.subr.mxu0 0.0
        %1328 = vmatpush1.msra.mxu0 0.0
        %1329 = vmatprep.subr.mxu0 0.0
        %1330 = vmatpush1.msra.mxu0 0.0
        %1331 = vmatprep.mubr.f32.mxu0 0.0
        %v1332 = vand.u32 %v851, 4294901760
        %1333 = vmatmul.mubr.f32.gmra.mrb[0].mxu0 %v1332
        %v1334 = vpop.f32.mrb[0].mxu0
        %v1335 = vadd.f32 %v1260, %v1334
        %v1336 = vpop.f32.mrb[0].mxu0
        %1337 = vdwg.mxu0
        %v1338 = vld [vmem:[%s5] sm:$0x1]
        %v1340 = vlaneseq
        %v1341 = vshrl.u32 %v1340, 7
        %v1342 = vsub.s32 0, %v1341
        %v1343 = vrot.slane %v1338, %v1342
        %v1345 = vmul.f32 %v843, %v1343
        %v1346 = vsel %vm357, %v1345, 0.0
        %1347 = vadd.xlane.f32.xlu0 %v1346
        %v1348 = vpop.xlane.xlu0 %1347
        %v1350 = vcombine.high %v1335, %v1335
        %v1352 = vunpack.c.l.s4 1966171168
        %v1353 = vunpack.c.0.s8 %v1352
        %v1354 = vlaneseq
        %v1355 = vshrl.u32 %v1354, 7
        %v1356 = vsub.s32 %v1353, %v1355
        %v1357 = vrot.slane %v1335, %v1356
        %v1359 = vunpack.c.l.s4 1966171168
        %v1360 = vunpack.c.0.s8 %v1359
        %v1361 = vlaneseq
        %v1362 = vshrl.u32 %v1361, 7
        %v1363 = vsub.s32 %v1360, %v1362
        %v1364 = vrot.slane %v1350, %v1363
        %v1365 = vcombine.high %v1357, %v1357
        %v1366 = vcombine.high %v1364, %v1364
        %v1368 = vunpack.c.l.s4 1966171168
        %v1369 = vunpack.c.0.s8 %v1368
        %v1370 = vlaneseq
        %v1371 = vshrl.u32 %v1370, 7
        %v1372 = vsub.s32 %v1369, %v1371
        %v1373 = vrot.slane %v1357, %v1372
        %v1375 = vunpack.c.l.s4 1966171168
        %v1376 = vunpack.c.0.s8 %v1375
        %v1377 = vlaneseq
        %v1378 = vshrl.u32 %v1377, 7
        %v1379 = vsub.s32 %v1376, %v1378
        %v1380 = vrot.slane %v1364, %v1379
        %v1382 = vunpack.c.l.s4 1966171168
        %v1383 = vunpack.c.0.s8 %v1382
        %v1384 = vlaneseq
        %v1385 = vshrl.u32 %v1384, 7
        %v1386 = vsub.s32 %v1383, %v1385
        %v1387 = vrot.slane %v1365, %v1386
        %v1389 = vunpack.c.l.s4 1966171168
        %v1390 = vunpack.c.0.s8 %v1389
        %v1391 = vlaneseq
        %v1392 = vshrl.u32 %v1391, 7
        %v1393 = vsub.s32 %v1390, %v1392
        %v1394 = vrot.slane %v1366, %v1393
        %v1395 = vcombine.high %v1373, %v1373
        %v1396 = vcombine.high %v1380, %v1380
        %v1397 = vcombine.high %v1387, %v1387
        %v1398 = vcombine.high %v1394, %v1394
        %v1399 = vlaneseq
        %v1400 = vshrl.u32 %v1399, 7
        %v1401 = vsub.s32 0, %v1400
        %v1402 = vrot.slane %v1373, %v1401
        %v1403 = vlaneseq
        %v1404 = vshrl.u32 %v1403, 7
        %v1405 = vsub.s32 0, %v1404
        %v1406 = vrot.slane %v1387, %v1405
        %v1407 = vlaneseq
        %v1408 = vshrl.u32 %v1407, 7
        %v1409 = vsub.s32 0, %v1408
        %v1410 = vrot.slane %v1395, %v1409
        %v1411 = vlaneseq
        %v1412 = vshrl.u32 %v1411, 7
        %v1413 = vsub.s32 0, %v1412
        %v1414 = vrot.slane %v1397, %v1413
        %v1415 = vlaneseq
        %v1416 = vshrl.u32 %v1415, 7
        %v1417 = vsub.s32 0, %v1416
        %v1418 = vrot.slane %v1380, %v1417
        %v1419 = vlaneseq
        %v1420 = vshrl.u32 %v1419, 7
        %v1421 = vsub.s32 0, %v1420
        %v1422 = vrot.slane %v1394, %v1421
        %v1423 = vlaneseq
        %v1424 = vshrl.u32 %v1423, 7
        %v1425 = vsub.s32 0, %v1424
        %v1426 = vrot.slane %v1396, %v1425
        %v1427 = vlaneseq
        %v1428 = vshrl.u32 %v1427, 7
        %v1429 = vsub.s32 0, %v1428
        %v1430 = vrot.slane %v1398, %v1429
        %v1439 = vmul.f32 %v337, %v1402
        %v1440 = vmul.f32 %v338, %v1406
        %v1441 = vmul.f32 %v339, %v1410
        %v1442 = vmul.f32 %v340, %v1414
        %v1443 = vmul.f32 %v341, %v1418
        %v1444 = vmul.f32 %v342, %v1422
        %v1445 = vmul.f32 %v343, %v1426
        %v1446 = vmul.f32 %v344, %v1430
        %v1447 = vsel %vm357, %v1439, 0.0
        %1448 = vadd.xlane.f32.xlu0 %v1447
        %v1449 = vpop.xlane.xlu0 %1448
        %v1450 = vsel %vm357, %v1440, 0.0
        %1451 = vadd.xlane.f32.xlu0 %v1450
        %v1452 = vpop.xlane.xlu0 %1451
        %v1453 = vsel %vm357, %v1441, 0.0
        %1454 = vadd.xlane.f32.xlu0 %v1453
        %v1455 = vpop.xlane.xlu0 %1454
        %v1456 = vsel %vm357, %v1442, 0.0
        %1457 = vadd.xlane.f32.xlu0 %v1456
        %v1458 = vpop.xlane.xlu0 %1457
        %v1459 = vsel %vm357, %v1443, 0.0
        %1460 = vadd.xlane.f32.xlu0 %v1459
        %v1461 = vpop.xlane.xlu0 %1460
        %v1462 = vsel %vm357, %v1444, 0.0
        %1463 = vadd.xlane.f32.xlu0 %v1462
        %v1464 = vpop.xlane.xlu0 %1463
        %v1465 = vsel %vm357, %v1445, 0.0
        %1466 = vadd.xlane.f32.xlu0 %v1465
        %v1467 = vpop.xlane.xlu0 %1466
        %v1468 = vsel %vm357, %v1446, 0.0
        %1469 = vadd.xlane.f32.xlu0 %v1468
        %v1470 = vpop.xlane.xlu0 %1469
        %v1472 = vlaneseq
        %v1473 = vshrl.u32 %v1472, 7
        %v1474 = vsub.s32 0, %v1473
        %v1475 = vrot.slane %v1348, %v1474
        %v1476 = vlaneseq
        %v1477 = vshrl.u32 %v1476, 7
        %v1478 = vsub.s32 1, %v1477
        %v1479 = vrot.slane %v1348, %v1478
        %v1480 = vlaneseq
        %v1481 = vshrl.u32 %v1480, 7
        %v1482 = vsub.s32 2, %v1481
        %v1483 = vrot.slane %v1348, %v1482
        %v1484 = vlaneseq
        %v1485 = vshrl.u32 %v1484, 7
        %v1486 = vsub.s32 3, %v1485
        %v1487 = vrot.slane %v1348, %v1486
        %v1488 = vlaneseq
        %v1489 = vshrl.u32 %v1488, 7
        %v1490 = vsub.s32 4, %v1489
        %v1491 = vrot.slane %v1348, %v1490
        %v1492 = vlaneseq
        %v1493 = vshrl.u32 %v1492, 7
        %v1494 = vsub.s32 5, %v1493
        %v1495 = vrot.slane %v1348, %v1494
        %v1496 = vlaneseq
        %v1497 = vshrl.u32 %v1496, 7
        %v1498 = vsub.s32 6, %v1497
        %v1499 = vrot.slane %v1348, %v1498
        %v1500 = vlaneseq
        %v1501 = vshrl.u32 %v1500, 7
        %v1502 = vsub.s32 7, %v1501
        %v1503 = vrot.slane %v1348, %v1502
        %v1512 = vadd.f32 %v1449, %v1475
        %v1513 = vadd.f32 %v1452, %v1479
        %v1514 = vadd.f32 %v1455, %v1483
        %v1515 = vadd.f32 %v1458, %v1487
        %v1516 = vadd.f32 %v1461, %v1491
        %v1517 = vadd.f32 %v1464, %v1495
        %v1518 = vadd.f32 %v1467, %v1499
        %v1519 = vadd.f32 %v1470, %v1503
        %1528 = vset.pattern.permute.xlu0 0
        %1529 = vperm.xlu0 %1528, %v1512
        %v1530 = vpop.permute.xlu0 %1529
        %1531 = vset.pattern.permute.xlu0 0
        %1532 = vperm.xlu0 %1531, %v1513
        %v1533 = vpop.permute.xlu0 %1532
        %1534 = vset.pattern.permute.xlu0 0
        %1535 = vperm.xlu0 %1534, %v1514
        %v1536 = vpop.permute.xlu0 %1535
        %1537 = vset.pattern.permute.xlu0 0
        %1538 = vperm.xlu0 %1537, %v1515
        %v1539 = vpop.permute.xlu0 %1538
        %1540 = vset.pattern.permute.xlu0 0
        %1541 = vperm.xlu0 %1540, %v1516
        %v1542 = vpop.permute.xlu0 %1541
        %1543 = vset.pattern.permute.xlu0 0
        %1544 = vperm.xlu0 %1543, %v1517
        %v1545 = vpop.permute.xlu0 %1544
        %1546 = vset.pattern.permute.xlu0 0
        %1547 = vperm.xlu0 %1546, %v1518
        %v1548 = vpop.permute.xlu0 %1547
        %1549 = vset.pattern.permute.xlu0 0
        %1550 = vperm.xlu0 %1549, %v1519
        %v1551 = vpop.permute.xlu0 %1550
        %v1552 = vlaneseq
        %v1553 = vand.u32 %v1552, 127
        %v1554 = vlaneseq
        %v1555 = vshrl.u32 %v1554, 7
        %v1556 = vsub.s32 %v1553, %v1555
        %v1557 = vrot.slane %v1530, %v1556
        %v1558 = vlaneseq
        %v1559 = vshrl.u32 %v1558, 7
        %v1560 = vsub.s32 %v1553, %v1559
        %v1561 = vrot.slane %v1533, %v1560
        %v1562 = vlaneseq
        %v1563 = vshrl.u32 %v1562, 7
        %v1564 = vsub.s32 %v1553, %v1563
        %v1565 = vrot.slane %v1536, %v1564
        %v1566 = vlaneseq
        %v1567 = vshrl.u32 %v1566, 7
        %v1568 = vsub.s32 %v1553, %v1567
        %v1569 = vrot.slane %v1539, %v1568
        %v1570 = vlaneseq
        %v1571 = vshrl.u32 %v1570, 7
        %v1572 = vsub.s32 %v1553, %v1571
        %v1573 = vrot.slane %v1542, %v1572
        %v1574 = vlaneseq
        %v1575 = vshrl.u32 %v1574, 7
        %v1576 = vsub.s32 %v1553, %v1575
        %v1577 = vrot.slane %v1545, %v1576
        %v1578 = vlaneseq
        %v1579 = vshrl.u32 %v1578, 7
        %v1580 = vsub.s32 %v1553, %v1579
        %v1581 = vrot.slane %v1548, %v1580
        %v1582 = vlaneseq
        %v1583 = vshrl.u32 %v1582, 7
        %v1584 = vsub.s32 %v1553, %v1583
        %v1585 = vrot.slane %v1551, %v1584
        %vm1586 = vcmask 1041409
        %v1587 = vsel %vm1586, %v1561, %v1557
        %vm1588 = vcmask 1042434
        %v1589 = vsel %vm1588, %v1565, %v1587
        %vm1590 = vcmask 1043459
        %v1591 = vsel %vm1590, %v1569, %v1589
        %vm1592 = vcmask 1044484
        %v1593 = vsel %vm1592, %v1573, %v1591
        %vm1594 = vcmask 1045509
        %v1595 = vsel %vm1594, %v1577, %v1593
        %vm1596 = vcmask 1046534
        %v1597 = vsel %vm1596, %v1581, %v1595
        %vm1598 = vcmask 1047559
        %v1599 = vsel %vm1598, %v1585, %v1597
        %vm1601 = vcmask 64512
        %v1602 = vsel %vm1601, %v1599, -inf
        %1603 = vmax.xlane.f32.xlu0 %v1602
        %v1604 = vpop.xlane.xlu0 %1603
        %v1606 = vlaneseq
        %v1607 = vshrl.u32 %v1606, 7
        %v1608 = vsub.s32 0, %v1607
        %v1609 = vrot.slane %v1604, %v1608
        %v1610 = vlaneseq
        %v1611 = vshrl.u32 %v1610, 7
        %v1612 = vsub.s32 1, %v1611
        %v1613 = vrot.slane %v1604, %v1612
        %v1614 = vlaneseq
        %v1615 = vshrl.u32 %v1614, 7
        %v1616 = vsub.s32 2, %v1615
        %v1617 = vrot.slane %v1604, %v1616
        %v1618 = vlaneseq
        %v1619 = vshrl.u32 %v1618, 7
        %v1620 = vsub.s32 3, %v1619
        %v1621 = vrot.slane %v1604, %v1620
        %v1622 = vlaneseq
        %v1623 = vshrl.u32 %v1622, 7
        %v1624 = vsub.s32 4, %v1623
        %v1625 = vrot.slane %v1604, %v1624
        %v1626 = vlaneseq
        %v1627 = vshrl.u32 %v1626, 7
        %v1628 = vsub.s32 5, %v1627
        %v1629 = vrot.slane %v1604, %v1628
        %v1630 = vlaneseq
        %v1631 = vshrl.u32 %v1630, 7
        %v1632 = vsub.s32 6, %v1631
        %v1633 = vrot.slane %v1604, %v1632
        %v1634 = vlaneseq
        %v1635 = vshrl.u32 %v1634, 7
        %v1636 = vsub.s32 7, %v1635
        %v1637 = vrot.slane %v1604, %v1636
        %v1646 = vsub.f32 %v1512, %v1609
        %v1647 = vsub.f32 %v1513, %v1613
        %v1648 = vsub.f32 %v1514, %v1617
        %v1649 = vsub.f32 %v1515, %v1621
        %v1650 = vsub.f32 %v1516, %v1625
        %v1651 = vsub.f32 %v1517, %v1629
        %v1652 = vsub.f32 %v1518, %v1633
        %v1653 = vsub.f32 %v1519, %v1637
        %v1654 = vmul.f32 %v1646, 1.442695
        %v1655 = vpow.pop %v1654
        %v1656 = vmul.f32 %v1647, 1.442695
        %v1657 = vpow.pop %v1656
        %v1658 = vmul.f32 %v1648, 1.442695
        %v1659 = vpow.pop %v1658
        %v1660 = vmul.f32 %v1649, 1.442695
        %v1661 = vpow.pop %v1660
        %v1662 = vmul.f32 %v1650, 1.442695
        %v1663 = vpow.pop %v1662
        %v1664 = vmul.f32 %v1651, 1.442695
        %v1665 = vpow.pop %v1664
        %v1666 = vmul.f32 %v1652, 1.442695
        %v1667 = vpow.pop %v1666
        %v1668 = vmul.f32 %v1653, 1.442695
        %v1669 = vpow.pop %v1668
        %1678 = vset.pattern.permute.xlu0 0
        %1679 = vperm.xlu0 %1678, %v1655
        %v1680 = vpop.permute.xlu0 %1679
        %1681 = vset.pattern.permute.xlu0 0
        %1682 = vperm.xlu0 %1681, %v1657
        %v1683 = vpop.permute.xlu0 %1682
        %1684 = vset.pattern.permute.xlu0 0
        %1685 = vperm.xlu0 %1684, %v1659
        %v1686 = vpop.permute.xlu0 %1685
        %1687 = vset.pattern.permute.xlu0 0
        %1688 = vperm.xlu0 %1687, %v1661
        %v1689 = vpop.permute.xlu0 %1688
        %1690 = vset.pattern.permute.xlu0 0
        %1691 = vperm.xlu0 %1690, %v1663
        %v1692 = vpop.permute.xlu0 %1691
        %1693 = vset.pattern.permute.xlu0 0
        %1694 = vperm.xlu0 %1693, %v1665
        %v1695 = vpop.permute.xlu0 %1694
        %1696 = vset.pattern.permute.xlu0 0
        %1697 = vperm.xlu0 %1696, %v1667
        %v1698 = vpop.permute.xlu0 %1697
        %1699 = vset.pattern.permute.xlu0 0
        %1700 = vperm.xlu0 %1699, %v1669
        %v1701 = vpop.permute.xlu0 %1700
        %v1702 = vlaneseq
        %v1703 = vshrl.u32 %v1702, 7
        %v1704 = vsub.s32 %v1553, %v1703
        %v1705 = vrot.slane %v1680, %v1704
        %v1706 = vlaneseq
        %v1707 = vshrl.u32 %v1706, 7
        %v1708 = vsub.s32 %v1553, %v1707
        %v1709 = vrot.slane %v1683, %v1708
        %v1710 = vlaneseq
        %v1711 = vshrl.u32 %v1710, 7
        %v1712 = vsub.s32 %v1553, %v1711
        %v1713 = vrot.slane %v1686, %v1712
        %v1714 = vlaneseq
        %v1715 = vshrl.u32 %v1714, 7
        %v1716 = vsub.s32 %v1553, %v1715
        %v1717 = vrot.slane %v1689, %v1716
        %v1718 = vlaneseq
        %v1719 = vshrl.u32 %v1718, 7
        %v1720 = vsub.s32 %v1553, %v1719
        %v1721 = vrot.slane %v1692, %v1720
        %v1722 = vlaneseq
        %v1723 = vshrl.u32 %v1722, 7
        %v1724 = vsub.s32 %v1553, %v1723
        %v1725 = vrot.slane %v1695, %v1724
        %v1726 = vlaneseq
        %v1727 = vshrl.u32 %v1726, 7
        %v1728 = vsub.s32 %v1553, %v1727
        %v1729 = vrot.slane %v1698, %v1728
        %v1730 = vlaneseq
        %v1731 = vshrl.u32 %v1730, 7
        %v1732 = vsub.s32 %v1553, %v1731
        %v1733 = vrot.slane %v1701, %v1732
        %v1734 = vsel %vm1586, %v1709, %v1705
        %v1735 = vsel %vm1588, %v1713, %v1734
        %v1736 = vsel %vm1590, %v1717, %v1735
        %v1737 = vsel %vm1592, %v1721, %v1736
        %v1738 = vsel %vm1594, %v1725, %v1737
        %v1739 = vsel %vm1596, %v1729, %v1738
        %v1740 = vsel %vm1598, %v1733, %v1739
        %v1742 = vsel %vm1601, %v1740, 0.0
        %1743 = vadd.xlane.f32.xlu0 %v1742
        %v1744 = vpop.xlane.xlu0 %1743
        %v1746 = vlaneseq
        %v1747 = vshrl.u32 %v1746, 7
        %v1748 = vsub.s32 0, %v1747
        %v1749 = vrot.slane %v1744, %v1748
        %v1750 = vlaneseq
        %v1751 = vshrl.u32 %v1750, 7
        %v1752 = vsub.s32 1, %v1751
        %v1753 = vrot.slane %v1744, %v1752
        %v1754 = vlaneseq
        %v1755 = vshrl.u32 %v1754, 7
        %v1756 = vsub.s32 2, %v1755
        %v1757 = vrot.slane %v1744, %v1756
        %v1758 = vlaneseq
        %v1759 = vshrl.u32 %v1758, 7
        %v1760 = vsub.s32 3, %v1759
        %v1761 = vrot.slane %v1744, %v1760
        %v1762 = vlaneseq
        %v1763 = vshrl.u32 %v1762, 7
        %v1764 = vsub.s32 4, %v1763
        %v1765 = vrot.slane %v1744, %v1764
        %v1766 = vlaneseq
        %v1767 = vshrl.u32 %v1766, 7
        %v1768 = vsub.s32 5, %v1767
        %v1769 = vrot.slane %v1744, %v1768
        %v1770 = vlaneseq
        %v1771 = vshrl.u32 %v1770, 7
        %v1772 = vsub.s32 6, %v1771
        %v1773 = vrot.slane %v1744, %v1772
        %v1774 = vlaneseq
        %v1775 = vshrl.u32 %v1774, 7
        %v1776 = vsub.s32 7, %v1775
        %v1777 = vrot.slane %v1744, %v1776
        %v1786 = vrcp.pop %v1749
        %v1787 = vmul.f32 %v1655, %v1786
        %v1788 = vrcp.pop %v1753
        %v1789 = vmul.f32 %v1657, %v1788
        %v1790 = vrcp.pop %v1757
        %v1791 = vmul.f32 %v1659, %v1790
        %v1792 = vrcp.pop %v1761
        %v1793 = vmul.f32 %v1661, %v1792
        %v1794 = vrcp.pop %v1765
        %v1795 = vmul.f32 %v1663, %v1794
        %v1796 = vrcp.pop %v1769
        %v1797 = vmul.f32 %v1665, %v1796
        %v1798 = vrcp.pop %v1773
        %v1799 = vmul.f32 %v1667, %v1798
        %v1800 = vrcp.pop %v1777
        %v1801 = vmul.f32 %v1669, %v1800
        %1803 = vset.pattern.permute.xlu0 0
        %1804 = vperm.xlu0 %1803, %v1787
        %v1805 = vpop.permute.xlu0 %1804
        %1808 = vset.pattern.permute.xlu0 0
        %1809 = vperm.xlu0 %1808, %v1789
        %v1810 = vpop.permute.xlu0 %1809
        %1813 = vset.pattern.permute.xlu0 0
        %1814 = vperm.xlu0 %1813, %v1791
        %v1815 = vpop.permute.xlu0 %1814
        %1818 = vset.pattern.permute.xlu0 0
        %1819 = vperm.xlu0 %1818, %v1793
        %v1820 = vpop.permute.xlu0 %1819
        %1823 = vset.pattern.permute.xlu0 0
        %1824 = vperm.xlu0 %1823, %v1795
        %v1825 = vpop.permute.xlu0 %1824
        %1828 = vset.pattern.permute.xlu0 0
        %1829 = vperm.xlu0 %1828, %v1797
        %v1830 = vpop.permute.xlu0 %1829
        %1833 = vset.pattern.permute.xlu0 0
        %1834 = vperm.xlu0 %1833, %v1799
        %v1835 = vpop.permute.xlu0 %1834
        %1838 = vset.pattern.permute.xlu0 0
        %1839 = vperm.xlu0 %1838, %v1801
        %v1840 = vpop.permute.xlu0 %1839
        %v1842 = vmul.f32 %v1805, %v337
        %v1843 = vmul.f32 %v1810, %v338
        %v1844 = vmul.f32 %v1815, %v339
        %v1845 = vmul.f32 %v1820, %v340
        %v1846 = vmul.f32 %v1825, %v341
        %v1847 = vmul.f32 %v1830, %v342
        %v1848 = vmul.f32 %v1835, %v343
        %v1849 = vmul.f32 %v1840, %v344
        %v1850 = vsel %vm357, %v1842, 0.0
        %v1851 = vrot.slane %v1850, 4
        %v1852 = vadd.f32 %v1850, %v1851
        %v1853 = vrot.slane %v1852, 2
        %v1854 = vadd.f32 %v1852, %v1853
        %v1855 = vrot.slane %v1854, 1
        %v1856 = vadd.f32 %v1854, %v1855
        %v1857 = vsel %vm357, %v1843, 0.0
        %v1858 = vrot.slane %v1857, 4
        %v1859 = vadd.f32 %v1857, %v1858
        %v1860 = vrot.slane %v1859, 2
        %v1861 = vadd.f32 %v1859, %v1860
        %v1862 = vrot.slane %v1861, 1
        %v1863 = vadd.f32 %v1861, %v1862
        %v1864 = vsel %vm357, %v1844, 0.0
        %v1865 = vrot.slane %v1864, 4
        %v1866 = vadd.f32 %v1864, %v1865
        %v1867 = vrot.slane %v1866, 2
        %v1868 = vadd.f32 %v1866, %v1867
        %v1869 = vrot.slane %v1868, 1
        %v1870 = vadd.f32 %v1868, %v1869
        %v1871 = vsel %vm357, %v1845, 0.0
        %v1872 = vrot.slane %v1871, 4
        %v1873 = vadd.f32 %v1871, %v1872
        %v1874 = vrot.slane %v1873, 2
        %v1875 = vadd.f32 %v1873, %v1874
        %v1876 = vrot.slane %v1875, 1
        %v1877 = vadd.f32 %v1875, %v1876
        %v1878 = vsel %vm357, %v1846, 0.0
        %v1879 = vrot.slane %v1878, 4
        %v1880 = vadd.f32 %v1878, %v1879
        %v1881 = vrot.slane %v1880, 2
        %v1882 = vadd.f32 %v1880, %v1881
        %v1883 = vrot.slane %v1882, 1
        %v1884 = vadd.f32 %v1882, %v1883
        %v1885 = vsel %vm357, %v1847, 0.0
        %v1886 = vrot.slane %v1885, 4
        %v1887 = vadd.f32 %v1885, %v1886
        %v1888 = vrot.slane %v1887, 2
        %v1889 = vadd.f32 %v1887, %v1888
        %v1890 = vrot.slane %v1889, 1
        %v1891 = vadd.f32 %v1889, %v1890
        %v1892 = vsel %vm357, %v1848, 0.0
        %v1893 = vrot.slane %v1892, 4
        %v1894 = vadd.f32 %v1892, %v1893
        %v1895 = vrot.slane %v1894, 2
        %v1896 = vadd.f32 %v1894, %v1895
        %v1897 = vrot.slane %v1896, 1
        %v1898 = vadd.f32 %v1896, %v1897
        %v1899 = vsel %vm357, %v1849, 0.0
        %v1900 = vrot.slane %v1899, 4
        %v1901 = vadd.f32 %v1899, %v1900
        %v1902 = vrot.slane %v1901, 2
        %v1903 = vadd.f32 %v1901, %v1902
        %v1904 = vrot.slane %v1903, 1
        %v1905 = vadd.f32 %v1903, %v1904
        %v1914 = vsel %vm1586, %v1863, %v1856
        %v1915 = vsel %vm1588, %v1870, %v1914
        %v1916 = vsel %vm1590, %v1877, %v1915
        %v1917 = vsel %vm1592, %v1884, %v1916
        %v1918 = vsel %vm1594, %v1891, %v1917
        %v1919 = vsel %vm1596, %v1898, %v1918
        %v1920 = vsel %vm1598, %v1905, %v1919
        %1922 = vst.msk [vmem:[%s335] sm:$0xff] %vm357, %v1920
        %s1923 = sand.u32 %s171, 1
        %s1924 = scalar_lea.sflag [#allocation4], %s1923
        %s1925 = sand.u32 %s171, 1
        %s1926 = smul.addr %s1925, 8
        %s1927 = scalar_lea.vmem [#allocation10], %s1926
        // Predicated region
        $region61: #{tpu_custom_call.1} parent=43 // pred_check
          %p1928 = pneg %p181
        $region62: #{tpu_custom_call.1} parent=43 // pred_check_branch
          %1930 = sbr.rel (%p1928) target = $region64
        $region63: #{tpu_custom_call.1} parent=43 // pred_region
          %s1932 = ssub.s32 128, 128
          %1933 = vsyncadd %s1924, %s1932
          %s1934 = smul.addr %s27, 128
          %s1935 = scalar_lea.hbm %s6, %s1934
          %s1937 = sshll.u32 %s1927, 4
          %s1938 = int_to_ptr.vmem [resolvable:$true] %s1937
          %1940 = dma.vmem_to_hbm [thread:$0]  %s1938, 128, %s1935, %s1924
        $region64: #{tpu_custom_call.1} parent=43 // pred_fallthru
          _
      $region44: #{tpu_custom_call.1} parent=5 // pred_fallthru
        _
      %p1941 = scmp.le.s32.totalorder 2, %s22
      // Predicated region
      $region65: #{tpu_custom_call.1} parent=5 // pred_check
        %p1942 = pneg %p1941
      $region66: #{tpu_custom_call.1} parent=5 // pred_check_branch
        %1944 = sbr.rel (%p1942) target = $region68
      $region67: #{tpu_custom_call.1} parent=5 // pred_region
        %s1945 = ssub.s32 %s22, 2
        // Predicated region
        $region69: #{tpu_custom_call.1} parent=67 // pred_check
          %p1946 = pneg %p187
        $region70: #{tpu_custom_call.1} parent=67 // pred_check_branch
          %1948 = sbr.rel (%p1946) target = $region72
        $region71: #{tpu_custom_call.1} parent=67 // pred_region
          %s1949 = sand.u32 %s172, 1
          %s1950 = scalar_lea.sflag [#allocation4], %s1949
          %s1951 = sand.u32 %s172, 1
          %s1952 = smul.addr %s1951, 8
          %s1953 = scalar_lea.vmem [#allocation10], %s1952
          %1954 = dma.done %s1950, 128
        $region72: #{tpu_custom_call.1} parent=67 // pred_fallthru
          _
      $region68: #{tpu_custom_call.1} parent=5 // pred_fallthru
        _
    $region6: #{tpu_custom_call.1} parent=1 // loop_footer
      %s26 = sadd.s32 1, %s22
    $region7: #{tpu_custom_call.1} parent=1 // loop_footer_branch
      %21 = sbr.rel target = $region3
    $region8: #{tpu_custom_call.1} parent=1 // loop_exit
      _
    %1955 = vsyncpa [#allocation3], 1
    %s1956 = scalar_lea.sflag [#allocation3], 1
    %1957 = vsyncpa %s1956, 1
    %1958 = vsyncpa [#allocation6], 1
    %s1959 = scalar_lea.sflag [#allocation6], 1
    %1960 = vsyncpa %s1959, 1
    %1961 = vsyncpa [#allocation9], 1
    %1962 = vsyncpa [#allocation4], 1
    %s1963 = scalar_lea.sflag [#allocation4], 1
    %1964 = vsyncpa %s1963, 1

</llo_original>
